<compile_context>
chip_gen: v7x
topology: tpu7x:2x2x1
jax: 0.10.0
libtpu: 0.0.40
codegen_flags: <defaults>
</compile_context>

<pallas_src>
import functools
import math

import jax
import jax.numpy as jnp
from jax.experimental import pallas as pl
from jax.experimental.pallas import tpu as pltpu

_NEG_INF = -1.0e30  # large finite negative: no inf-inf NaN hazards


def _round_up(x, m):
    return ((x + m - 1) // m) * m


def _attention_step(q_ref, k_ref, v_ref, o_ref, qs_ref, m_ref, l_ref, acc_ref,
                    *, qi, ki, is_first, is_last, softmax_scale, causal,
                    kv_len, kv_len_padded, block_q, block_k):
    """One (q_tile, kv_tile) online-softmax (flash) update. Refs are VMEM tiles.

    q (TQ, Dp), k/v (TK, Dp), o (TQ, Dp); scratch: qs (TQ, Dp) scaled-Q cache,
    m/l (TQ, 1) f32 running max / sum, acc (TQ, Dp) f32 accumulator.
    """

    @pl.when(is_first)
    def _init():
        m_ref[...] = jnp.full(m_ref.shape, _NEG_INF, dtype=jnp.float32)
        l_ref[...] = jnp.zeros(l_ref.shape, dtype=jnp.float32)
        acc_ref[...] = jnp.zeros(acc_ref.shape, dtype=jnp.float32)
        # Cache the scaled Q tile once per (bh, q-tile) group (perf review):
        # no per-kv-step rescale or q_ref reload.
        qs_ref[...] = (q_ref[...].astype(jnp.float32)
                       * jnp.float32(softmax_scale)).astype(qs_ref.dtype)

    q = qs_ref[...]
    k = k_ref[...]
    v = v_ref[...]

    # QK^T without materializing k.T: contract the D axis of both operands.
    s = jax.lax.dot_general(q, k, (((1,), (1,)), ((), ())),
                            preferred_element_type=jnp.float32)  # (TQ, TK) f32

    need_len_mask = kv_len != kv_len_padded  # static python bool
    if causal or need_len_mask:
        col = ki * block_k + jax.lax.broadcasted_iota(
            jnp.int32, (block_q, block_k), 1)
        if causal:
            row = qi * block_q + jax.lax.broadcasted_iota(
                jnp.int32, (block_q, block_k), 0)
            keep = col <= row
            if need_len_mask:
                keep = jnp.logical_and(keep, col < kv_len)
        else:
            keep = col < kv_len
        s = jnp.where(keep, s, _NEG_INF)

    m_prev = m_ref[...]                                           # (TQ, 1)
    m_new = jnp.maximum(m_prev, jnp.max(s, axis=-1, keepdims=True))
    alpha = jnp.exp(m_prev - m_new)                               # (TQ, 1)
    p = jnp.exp(s - m_new)                                        # (TQ, TK) f32

    l_ref[...] = alpha * l_ref[...] + jnp.sum(p, axis=-1, keepdims=True)
    acc_ref[...] = alpha * acc_ref[...] + jnp.dot(
        p.astype(v.dtype), v, preferred_element_type=jnp.float32)
    m_ref[...] = m_new

    @pl.when(is_last)
    def _finalize():
        # Exact normalization (runs once per q tile) — the approx reciprocal
        # was the source of the previous causal-test failure.
        l = l_ref[...]
        l = jnp.where(l == 0.0, 1.0, l)   # guard fully-masked (padded) rows
        o_ref[...] = (acc_ref[...] / l).astype(o_ref.dtype)


def _dense_kernel(q_ref, k_ref, v_ref, o_ref, qs_ref, m_ref, l_ref, acc_ref,
                  *, softmax_scale, kv_len, kv_len_padded, block_q, block_k):
    qi = pl.program_id(1)
    ki = pl.program_id(2)
    _attention_step(q_ref, k_ref, v_ref, o_ref, qs_ref, m_ref, l_ref, acc_ref,
                    qi=qi, ki=ki,
                    is_first=ki == 0,
                    is_last=ki == pl.num_programs(2) - 1,
                    softmax_scale=softmax_scale, causal=False,
                    kv_len=kv_len, kv_len_padded=kv_len_padded,
                    block_q=block_q, block_k=block_k)


def _causal_kernel(qi_map_ref, ki_map_ref, last_map_ref,
                   q_ref, k_ref, v_ref, o_ref, qs_ref, m_ref, l_ref, acc_ref,
                   *, softmax_scale, kv_len, kv_len_padded, block_q, block_k):
    # Flattened triangular grid: only on/below-diagonal (qi, ki) pairs exist.
    t = pl.program_id(1)
    qi = qi_map_ref[t]
    ki = ki_map_ref[t]
    _attention_step(q_ref, k_ref, v_ref, o_ref, qs_ref, m_ref, l_ref, acc_ref,
                    qi=qi, ki=ki,
                    is_first=ki == 0,
                    is_last=last_map_ref[t] == 1,
                    softmax_scale=softmax_scale, causal=True,
                    kv_len=kv_len, kv_len_padded=kv_len_padded,
                    block_q=block_q, block_k=block_k)


def async_hybrid_attention(query, key, value, *, dropout_p=0.0,
                           softmax_scale=None, causal=False,
                           window_size=(-1, -1), alibi_slopes=None,
                           deterministic=False, return_attn_probs=False,
                           block_q=512, block_k=512, matmul_dtype=None):
    """Single-device forward of AsyncHybridAttention.

    query/key/value: (bs, seqlen, heads, head_dim), same as the PyTorch module
    with ulysses_degree == ring world size == 1 (shard_seqlen == seqlen,
    hc_kv == hc).  Returns (bs, seqlen, heads, head_dim) in query.dtype.

    Tiling notes (perf review): block_q/block_k default 512 (good on v5e/v7x,
    bump block_q to 768–1024 on v6e for a fully MXU-bound roofline); both are
    clamped to the 128-padded sequence.  VMEM use at 512/512, Dp=128, f32 is
    ~3 MiB — far under every generation's scoped limit (incl. v7x 32 MiB).
    """
    assert dropout_p == 0.0, "dropout not supported (module default is 0.0)"
    assert tuple(window_size) == (-1, -1), "sliding window not supported"
    assert alibi_slopes is None, "alibi not supported"
    assert not return_attn_probs, "return_attn_probs not supported"
    bs, S, H, D = query.shape
    assert key.shape == (bs, S, H, D) and value.shape == (bs, S, H, D)
    if softmax_scale is None:
        softmax_scale = 1.0 / math.sqrt(D)

    # ---- tiling: multiples of 128, clamped to the padded sequence ----
    s128 = _round_up(S, 128)
    TQ = min(max(128, (block_q // 128) * 128), s128)
    TK = min(max(128, (block_k // 128) * 128), s128)
    Sp = _round_up(S, math.lcm(TQ, TK))   # padded sequence (masked in kernel)
    Dp = _round_up(D, 128)                # lane-dense blocks / full MXU lanes

    compute_dtype = query.dtype if matmul_dtype is None else matmul_dtype

    # (bs, S, H, D) -> (bs*H, Sp, Dp): one grid batch-dim entry per (batch, head)
    def to_bh(x):
        x = jnp.transpose(x, (0, 2, 1, 3)).reshape(bs * H, S, D)
        if (Sp, Dp) != (S, D):
            x = jnp.pad(x, ((0, 0), (0, Sp - S), (0, Dp - D)))
        return x.astype(compute_dtype)

    q_bh, k_bh, v_bh = to_bh(query), to_bh(key), to_bh(value)
    BH = bs * H
    nq, nk = Sp // TQ, Sp // TK

    scratch_shapes = [
        pltpu.VMEM((TQ, Dp), compute_dtype),   # scaled-Q cache
        pltpu.VMEM((TQ, 1), jnp.float32),      # m (running max)
        pltpu.VMEM((TQ, 1), jnp.float32),      # l (running sum)
        pltpu.VMEM((TQ, Dp), jnp.float32),     # acc
    ]
    common = dict(softmax_scale=softmax_scale, kv_len=S, kv_len_padded=Sp,
                  block_q=TQ, block_k=TK)

    if not causal:
        kernel = functools.partial(_dense_kernel, **common)
        grid_spec = pltpu.PrefetchScalarGridSpec(
            num_scalar_prefetch=0,
            grid=(BH, nq, nk),
            in_specs=[
                pl.BlockSpec((None, TQ, Dp), lambda b, qi, ki: (b, qi, 0)),
                pl.BlockSpec((None, TK, Dp), lambda b, qi, ki: (b, ki, 0)),
                pl.BlockSpec((None, TK, Dp), lambda b, qi, ki: (b, ki, 0)),
            ],
            out_specs=pl.BlockSpec((None, TQ, Dp), lambda b, qi, ki: (b, qi, 0)),
            scratch_shapes=scratch_shapes,
        )
        out_bh = pl.pallas_call(
            kernel,
            out_shape=jax.ShapeDtypeStruct((BH, Sp, Dp), query.dtype),
            grid_spec=grid_spec,
            compiler_params=pltpu.CompilerParams(
                dimension_semantics=("parallel", "parallel", "arbitrary")),
        )(q_bh, k_bh, v_bh)
    else:
        # Triangular flattened (qi, ki) grid: above-diagonal tiles never visited,
        # so no DMA / per-step overhead is paid for them (perf review).
        pairs = [(qi, ki) for qi in range(nq) for ki in range(nk)
                 if ki * TK <= qi * TQ + TQ - 1]
        last_ki = {qi: min(nk - 1, (qi * TQ + TQ - 1) // TK) for qi in range(nq)}
        qi_map = jnp.asarray([p[0] for p in pairs], dtype=jnp.int32)
        ki_map = jnp.asarray([p[1] for p in pairs], dtype=jnp.int32)
        last_map = jnp.asarray([1 if ki == last_ki[qi] else 0
                                for qi, ki in pairs], dtype=jnp.int32)
        T = len(pairs)

        kernel = functools.partial(_causal_kernel, **common)
        grid_spec = pltpu.PrefetchScalarGridSpec(
            num_scalar_prefetch=3,
            grid=(BH, T),
            in_specs=[
                pl.BlockSpec((None, TQ, Dp),
                             lambda b, t, qm, km, lm: (b, qm[t], 0)),
                pl.BlockSpec((None, TK, Dp),
                             lambda b, t, qm, km, lm: (b, km[t], 0)),
                pl.BlockSpec((None, TK, Dp),
                             lambda b, t, qm, km, lm: (b, km[t], 0)),
            ],
            out_specs=pl.BlockSpec((None, TQ, Dp),
                                   lambda b, t, qm, km, lm: (b, qm[t], 0)),
            scratch_shapes=scratch_shapes,
        )
        out_bh = pl.pallas_call(
            kernel,
            out_shape=jax.ShapeDtypeStruct((BH, Sp, Dp), query.dtype),
            grid_spec=grid_spec,
            compiler_params=pltpu.CompilerParams(
                dimension_semantics=("parallel", "arbitrary")),
        )(qi_map, ki_map, last_map, q_bh, k_bh, v_bh)

    # (bs*H, Sp, Dp) -> (bs, S, H, D)  (matches the torch.cat(..., dim=2) assembly)
    out = out_bh.reshape(bs, H, Sp, Dp)[:, :, :S, :D]
    return jnp.transpose(out, (0, 2, 1, 3))


def _reference(query, key, value, softmax_scale=None, causal=False):
    if softmax_scale is None:
        softmax_scale = 1.0 / math.sqrt(query.shape[-1])
    q = query.astype(jnp.float32)
    k = key.astype(jnp.float32)
    v = value.astype(jnp.float32)
    s = jnp.einsum("bqhd,bkhd->bhqk", q, k) * softmax_scale
    if causal:
        S = q.shape[1]
        mask = jnp.tril(jnp.ones((S, S), dtype=bool))
        s = jnp.where(mask[None, None], s, -jnp.inf)
    p = jax.nn.softmax(s, axis=-1)
    o = jnp.einsum("bhqk,bkhd->bqhd", p, v)
    return o.astype(query.dtype)


def _check(q, k, v, causal, block_q=512, block_k=512, atol=1e-3, rtol=1e-3):
    out = jax.block_until_ready(
        async_hybrid_attention(q, k, v, causal=causal,
                               block_q=block_q, block_k=block_k))
    ref = _reference(q, k, v, causal=causal)
    assert out.shape == q.shape, (out.shape, q.shape)
    assert out.dtype == q.dtype
    err = float(jnp.max(jnp.abs(out.astype(jnp.float32) - ref.astype(jnp.float32))))
    assert jnp.allclose(out, ref, atol=atol, rtol=rtol), err
    return out


if __name__ == "__main__":
    # Shapes follow the module's (bs, seqlen, hc, hs) convention.
    root = jax.random.PRNGKey(0)

    # Config 1: tiny (bs=2, seqlen=8, hc=4, hs=32) — exercises seq & head-dim
    # padding (8->128, 32->128) with length masking.
    kq, kk, kv = jax.random.split(root, 3)
    q1 = jax.random.normal(kq, (2, 8, 4, 32), dtype=jnp.float32)
    k1 = jax.random.normal(kk, (2, 8, 4, 32), dtype=jnp.float32)
    v1 = jax.random.normal(kv, (2, 8, 4, 32), dtype=jnp.float32)
    _check(q1, k1, v1, causal=False)
    _check(q1, k1, v1, causal=True)

    # Config 2: (bs=1, seqlen=256, hc=2, hs=64) with 128x128 tiles — exercises
    # the multi-tile online softmax and the triangular scalar-prefetch grid.
    kq2, kk2, kv2 = jax.random.split(jax.random.PRNGKey(1), 3)
    q2 = jax.random.normal(kq2, (1, 256, 2, 64), dtype=jnp.float32)
    k2 = jax.random.normal(kk2, (1, 256, 2, 64), dtype=jnp.float32)
    v2 = jax.random.normal(kv2, (1, 256, 2, 64), dtype=jnp.float32)
    _check(q2, k2, v2, causal=False, block_q=128, block_k=128)
    _check(q2, k2, v2, causal=True, block_q=128, block_k=128)

    print("KERNEL_OK")
</pallas_src>

<mosaic_0001>
module attributes {stable_mosaic.version = 11 : i64} {
  func.func @_dense_kernel(%arg0: i32, %arg1: i32, %arg2: i32, %arg3: memref<1x128x128xf32, #tpu.memory_space<vmem>>, %arg4: memref<1x128x128xf32, #tpu.memory_space<vmem>>, %arg5: memref<1x128x128xf32, #tpu.memory_space<vmem>>, %arg6: memref<1x128x128xf32, #tpu.memory_space<vmem>>, %arg7: memref<128x128xf32, #tpu.memory_space<vmem>>, %arg8: memref<128x1xf32, #tpu.memory_space<vmem>>, %arg9: memref<128x1xf32, #tpu.memory_space<vmem>>, %arg10: memref<128x128xf32, #tpu.memory_space<vmem>>) attributes {dimension_semantics = [#tpu.dimension_semantics<parallel>, #tpu.dimension_semantics<parallel>, #tpu.dimension_semantics<arbitrary>], iteration_bounds = array<i64: 8, 1, 1>, scalar_prefetch = 0 : i64, scratch_operands = 4 : i64, tpu.core_type = #tpu.core_type<tc>, window_params = [{transform_indices = @transform_0, window_bounds = array<i64: 1, 128, 128>}, {transform_indices = @transform_1, window_bounds = array<i64: 1, 128, 128>}, {transform_indices = @transform_2, window_bounds = array<i64: 1, 128, 128>}, {transform_indices = @transform_3, window_bounds = array<i64: 1, 128, 128>}]} {
    %c0_i32 = arith.constant 0 : i32
    %0 = arith.cmpi eq, %arg2, %c0_i32 : i32
    %c0_i32_0 = arith.constant 0 : i32
    %1 = arith.cmpi eq, %arg2, %c0_i32_0 : i32
    %2 = arith.extui %0 : i1 to i32
    %c0_i32_1 = arith.constant 0 : i32
    %3 = arith.cmpi ne, %2, %c0_i32_1 : i32
    scf.if %3 {
      %cst_26 = arith.constant -1.000000e+30 : f32
      %42 = vector.broadcast %cst_26 : f32 to vector<128x1xf32>
      %c0_27 = arith.constant 0 : index
      %c0_28 = arith.constant 0 : index
      %43 = vector.load %arg8[%c0_27, %c0_28] : memref<128x1xf32, #tpu.memory_space<vmem>>, vector<128x1xf32>
      tpu.vector_store %arg8[%c0_27, %c0_28], %42 {strides = array<i32>} : memref<128x1xf32, #tpu.memory_space<vmem>>, vector<128x1xf32>,
      %cst_29 = arith.constant 0.000000e+00 : f32
      %44 = vector.broadcast %cst_29 : f32 to vector<128x1xf32>
      %c0_30 = arith.constant 0 : index
      %c0_31 = arith.constant 0 : index
      %45 = vector.load %arg9[%c0_30, %c0_31] : memref<128x1xf32, #tpu.memory_space<vmem>>, vector<128x1xf32>
      tpu.vector_store %arg9[%c0_30, %c0_31], %44 {strides = array<i32>} : memref<128x1xf32, #tpu.memory_space<vmem>>, vector<128x1xf32>,
      %cst_32 = arith.constant 0.000000e+00 : f32
      %46 = vector.broadcast %cst_32 : f32 to vector<128x128xf32>
      %c0_33 = arith.constant 0 : index
      %c0_34 = arith.constant 0 : index
      %47 = vector.load %arg10[%c0_33, %c0_34] : memref<128x128xf32, #tpu.memory_space<vmem>>, vector<128x128xf32>
      tpu.vector_store %arg10[%c0_33, %c0_34], %46 {strides = array<i32>} : memref<128x128xf32, #tpu.memory_space<vmem>>, vector<128x128xf32>,
      %c0_35 = arith.constant 0 : index
      %c0_36 = arith.constant 0 : index
      %c0_37 = arith.constant 0 : index
      %48 = vector.load %arg3[%c0_35, %c0_36, %c0_37] : memref<1x128x128xf32, #tpu.memory_space<vmem>>, vector<1x128x128xf32>
      %49 = vector.shape_cast %48 : vector<1x128x128xf32> to vector<128x128xf32>
      %cst_38 = arith.constant 0.176776692 : f32
      %50 = vector.broadcast %cst_38 : f32 to vector<128x128xf32>
      %51 = arith.mulf %49, %50 : vector<128x128xf32>
      %c0_39 = arith.constant 0 : index
      %c0_40 = arith.constant 0 : index
      %52 = vector.load %arg7[%c0_39, %c0_40] : memref<128x128xf32, #tpu.memory_space<vmem>>, vector<128x128xf32>
      tpu.vector_store %arg7[%c0_39, %c0_40], %51 {strides = array<i32>} : memref<128x128xf32, #tpu.memory_space<vmem>>, vector<128x128xf32>,
    } else {
    }
    %c0 = arith.constant 0 : index
    %c0_2 = arith.constant 0 : index
    %4 = vector.load %arg7[%c0, %c0_2] : memref<128x128xf32, #tpu.memory_space<vmem>>, vector<128x128xf32>
    %c0_3 = arith.constant 0 : index
    %c0_4 = arith.constant 0 : index
    %c0_5 = arith.constant 0 : index
    %5 = vector.load %arg4[%c0_3, %c0_4, %c0_5] : memref<1x128x128xf32, #tpu.memory_space<vmem>>, vector<1x128x128xf32>
    %6 = vector.shape_cast %5 : vector<1x128x128xf32> to vector<128x128xf32>
    %c0_6 = arith.constant 0 : index
    %c0_7 = arith.constant 0 : index
    %c0_8 = arith.constant 0 : index
    %7 = vector.load %arg5[%c0_6, %c0_7, %c0_8] : memref<1x128x128xf32, #tpu.memory_space<vmem>>, vector<1x128x128xf32>
    %8 = vector.shape_cast %7 : vector<1x128x128xf32> to vector<128x128xf32>
    %cst = arith.constant dense<0.000000e+00> : vector<128x128xf32>
    %9 = tpu.matmul %4, %6, %cst {dimension_numbers = #tpu.dot_dimension_numbers<[1], [1], [0], [0], [0, 0, 1, 0], [], []>} : vector<128x128xf32>, vector<128x128xf32>, vector<128x128xf32> -> vector<128x128xf32>
    %c128_i32 = arith.constant 128 : i32
    %10 = arith.muli %arg2, %c128_i32 : i32
    %11 = tpu.iota {dimensions = array<i32: 1>} : vector<128x128xi32>
    %12 = vector.broadcast %10 : i32 to vector<128x128xi32>
    %13 = arith.addi %12, %11 : vector<128x128xi32>
    %c8_i32 = arith.constant 8 : i32
    %14 = vector.broadcast %c8_i32 : i32 to vector<128x128xi32>
    %15 = arith.cmpi slt, %13, %14 : vector<128x128xi32>
    %cst_9 = arith.constant -1.000000e+30 : f32
    %16 = vector.broadcast %cst_9 : f32 to vector<128x128xf32>
    %17 = arith.select %15, %9, %16 : vector<128x128xi1>, vector<128x128xf32>
    %c0_10 = arith.constant 0 : index
    %c0_11 = arith.constant 0 : index
    %18 = vector.load %arg8[%c0_10, %c0_11] : memref<128x1xf32, #tpu.memory_space<vmem>>, vector<128x1xf32>
    %cst_12 = arith.constant dense<0xFF800000> : vector<128xf32>
    %19 = vector.multi_reduction <maximumf>, %17, %cst_12 [1] : vector<128x128xf32> to vector<128xf32>
    %20 = vector.shape_cast %19 : vector<128xf32> to vector<128x1xf32>
    %21 = arith.maximumf %18, %20 : vector<128x1xf32>
    %22 = arith.subf %18, %21 : vector<128x1xf32>
    %23 = math.exp %22 : vector<128x1xf32>
    %24 = vector.broadcast %21 : vector<128x1xf32> to vector<128x128xf32>
    %25 = arith.subf %17, %24 : vector<128x128xf32>
    %26 = math.exp %25 : vector<128x128xf32>
    %c0_13 = arith.constant 0 : index
    %c0_14 = arith.constant 0 : index
    %27 = vector.load %arg9[%c0_13, %c0_14] : memref<128x1xf32, #tpu.memory_space<vmem>>, vector<128x1xf32>
    %28 = arith.mulf %23, %27 : vector<128x1xf32>
    %cst_15 = arith.constant dense<0.000000e+00> : vector<128xf32>
    %29 = vector.multi_reduction <add>, %26, %cst_15 [1] : vector<128x128xf32> to vector<128xf32>
    %30 = vector.shape_cast %29 : vector<128xf32> to vector<128x1xf32>
    %31 = arith.addf %28, %30 : vector<128x1xf32>
    %c0_16 = arith.constant 0 : index
    %c0_17 = arith.constant 0 : index
    %32 = vector.load %arg9[%c0_16, %c0_17] : memref<128x1xf32, #tpu.memory_space<vmem>>, vector<128x1xf32>
    tpu.vector_store %arg9[%c0_16, %c0_17], %31 {strides = array<i32>} : memref<128x1xf32, #tpu.memory_space<vmem>>, vector<128x1xf32>,
    %c0_18 = arith.constant 0 : index
    %c0_19 = arith.constant 0 : index
    %33 = vector.load %arg10[%c0_18, %c0_19] : memref<128x128xf32, #tpu.memory_space<vmem>>, vector<128x128xf32>
    %34 = vector.broadcast %23 : vector<128x1xf32> to vector<128x128xf32>
    %35 = arith.mulf %34, %33 : vector<128x128xf32>
    %cst_20 = arith.constant dense<0.000000e+00> : vector<128x128xf32>
    %36 = tpu.matmul %26, %8, %cst_20 {dimension_numbers = #tpu.dot_dimension_numbers<[1], [0], [0], [1], [0, 0, 1, 1], [], []>} : vector<128x128xf32>, vector<128x128xf32>, vector<128x128xf32> -> vector<128x128xf32>
    %37 = arith.addf %35, %36 : vector<128x128xf32>
    %c0_21 = arith.constant 0 : index
    %c0_22 = arith.constant 0 : index
    %38 = vector.load %arg10[%c0_21, %c0_22] : memref<128x128xf32, #tpu.memory_space<vmem>>, vector<128x128xf32>
    tpu.vector_store %arg10[%c0_21, %c0_22], %37 {strides = array<i32>} : memref<128x128xf32, #tpu.memory_space<vmem>>, vector<128x128xf32>,
    %c0_23 = arith.constant 0 : index
    %c0_24 = arith.constant 0 : index
    %39 = vector.load %arg8[%c0_23, %c0_24] : memref<128x1xf32, #tpu.memory_space<vmem>>, vector<128x1xf32>
    tpu.vector_store %arg8[%c0_23, %c0_24], %21 {strides = array<i32>} : memref<128x1xf32, #tpu.memory_space<vmem>>, vector<128x1xf32>,
    %40 = arith.extui %1 : i1 to i32
    %c0_i32_25 = arith.constant 0 : i32
    %41 = arith.cmpi ne, %40, %c0_i32_25 : i32
    scf.if %41 {
      %c0_26 = arith.constant 0 : index
      %c0_27 = arith.constant 0 : index
      %42 = vector.load %arg9[%c0_26, %c0_27] : memref<128x1xf32, #tpu.memory_space<vmem>>, vector<128x1xf32>
      %cst_28 = arith.constant 0.000000e+00 : f32
      %43 = vector.broadcast %cst_28 : f32 to vector<128x1xf32>
      %44 = arith.cmpf oeq, %42, %43 : vector<128x1xf32>
      %cst_29 = arith.constant 1.000000e+00 : f32
      %45 = vector.broadcast %cst_29 : f32 to vector<128x1xf32>
      %46 = arith.select %44, %45, %42 : vector<128x1xi1>, vector<128x1xf32>
      %c0_30 = arith.constant 0 : index
      %c0_31 = arith.constant 0 : index
      %47 = vector.load %arg10[%c0_30, %c0_31] : memref<128x128xf32, #tpu.memory_space<vmem>>, vector<128x128xf32>
      %48 = vector.broadcast %46 : vector<128x1xf32> to vector<128x128xf32>
      %49 = arith.divf %47, %48 : vector<128x128xf32>
      %c0_32 = arith.constant 0 : index
      %c0_33 = arith.constant 0 : index
      %c0_34 = arith.constant 0 : index
      %50 = vector.load %arg6[%c0_32, %c0_33, %c0_34] : memref<1x128x128xf32, #tpu.memory_space<vmem>>, vector<1x128x128xf32>
      %51 = vector.shape_cast %50 : vector<1x128x128xf32> to vector<128x128xf32>
      %52 = vector.shape_cast %49 : vector<128x128xf32> to vector<1x128x128xf32>
      tpu.vector_store %arg6[%c0_32, %c0_33, %c0_34], %52 {strides = array<i32>} : memref<1x128x128xf32, #tpu.memory_space<vmem>>, vector<1x128x128xf32>,
    } else {
    }
    return
  }
  func.func @transform_0(%arg0: i32, %arg1: i32, %arg2: i32) -> (i32, i32, i32) {
    %c0_i32 = arith.constant 0 : i32
    %c0_i32_0 = arith.constant 0 : i32
    return %arg0, %arg1, %c0_i32 : i32, i32, i32
  }
  func.func @transform_1(%arg0: i32, %arg1: i32, %arg2: i32) -> (i32, i32, i32) {
    %c0_i32 = arith.constant 0 : i32
    %c0_i32_0 = arith.constant 0 : i32
    return %arg0, %arg2, %c0_i32 : i32, i32, i32
  }
  func.func @transform_2(%arg0: i32, %arg1: i32, %arg2: i32) -> (i32, i32, i32) {
    %c0_i32 = arith.constant 0 : i32
    %c0_i32_0 = arith.constant 0 : i32
    return %arg0, %arg2, %c0_i32 : i32, i32, i32
  }
  func.func @transform_3(%arg0: i32, %arg1: i32, %arg2: i32) -> (i32, i32, i32) {
    %c0_i32 = arith.constant 0 : i32
    %c0_i32_0 = arith.constant 0 : i32
    return %arg0, %arg1, %c0_i32 : i32, i32, i32
  }
}

</mosaic_0001>

<llo_original>
// kernel: tpu_custom_call.1
$region0: #{tpu_custom_call.1}
  #allocation0 [shape = 'u32[]', space=smem, size = 0x4, offset = 0x4, fixed_abs, tag = 'smem constant byte address 0x4 - core index']
  #allocation1 [shape = 'u32[144,128]{1,0:T(1,128)}', space=vmem, size = 0x12000, scoped, tag = 'internal scratch']
  #allocation2 [shape = 'f32[128,128]{1,0:T(8,128)}', space=vmem, size = 0x10000, scoped, tag = 'scratch operand']
  #allocation3 [shape = 'f32[128,1]{1,0:T(8,128)}', space=vmem, size = 0x10000, scoped, tag = 'scratch operand']
  #allocation4 [shape = 'f32[128,1]{1,0:T(8,128)}', space=vmem, size = 0x10000, scoped, tag = 'scratch operand']
  #allocation5 [shape = 'f32[128,128]{1,0:T(8,128)}', space=vmem, size = 0x10000, scoped, tag = 'scratch operand']
  %s0 = inlined_call_operand.hbm [shape: f32[8,128,128], index: 0, kind: input, shape index: {}]
  %s1 = inlined_call_operand.hbm [shape: f32[8,128,128], index: 1, kind: input, shape index: {}]
  %s2 = inlined_call_operand.hbm [shape: f32[8,128,128], index: 2, kind: input, shape index: {}]
  %s3 = inlined_call_operand.hbm [shape: f32[8,128,128], index: 3, kind: output, shape index: {}]
  %s4 = sld [smem:[#allocation0]]
  $region65: #{tpu_custom_call.1} parent=0
    _
  %s6 = ssub.s32 1, %s4
  %s7 = scalar_select 0, %s6, %s4
  $region1: #{tpu_custom_call.1} parent=0
    #allocation6 [shape = 'u8[131072]{0}', space=vmem, size = 0x20000, scoped, tag = 'input window, operand 0']
    #allocation7 [shape = 's32[2]{0}', space=sflag, size = 0x8, scoped, tag = 'scoped memory for tpu_custom_call.1']
    #allocation8 [shape = 's32[2]{0}', space=sflag, size = 0x8, scoped, tag = 'scoped memory for tpu_custom_call.1']
    #allocation9 [shape = 'u8[131072]{0}', space=vmem, size = 0x20000, scoped, tag = 'input window, operand 1']
    #allocation10 [shape = 's32[2]{0}', space=sflag, size = 0x8, scoped, tag = 'scoped memory for tpu_custom_call.1']
    #allocation11 [shape = 'u8[131072]{0}', space=vmem, size = 0x20000, scoped, tag = 'input window, operand 2']
    #allocation12 [shape = 'u8[131072]{0}', space=vmem, size = 0x20000, scoped, tag = 'output window, operand 0']
    %8 = vsyncpa [#allocation7], 0
    %s9 = scalar_lea.sflag [#allocation7], 1
    %10 = vsyncpa %s9, 0
    %11 = vsyncpa [#allocation10], 0
    %s12 = scalar_lea.sflag [#allocation10], 1
    %13 = vsyncpa %s12, 0
    %14 = vsyncpa [#allocation8], 0
    %s15 = scalar_lea.sflag [#allocation8], 1
    %16 = vsyncpa %s15, 0
    loop: start=0, step=1, limit=10
    $region2: #{tpu_custom_call.1} parent=1 // loop_pre_header
      _
    $region3: #{tpu_custom_call.1} parent=1 // loop_header
      %s18 = sphi 0, %s22
      %p19 = scmp.ge.s32.totalorder %s18, 10
      %s25 = sphi 0, %s44
      %s26 = sphi 0, %s40
      %s27 = sphi 0, %s36
      %s28 = sphi 0, %s25
      %s29 = sphi 0, %s26
      %s30 = sphi 0, %s27
      %s31 = sphi 0, %s28
      %s32 = sphi 0, %s29
      %s33 = sphi 0, %s30
      %s49 = sphi 0, %s51
      %s52 = sphi 0, %s49
      %s53 = sphi 0, %s52
      %s69 = sphi 0, %s53
      %s77 = sphi 0, %s79
      %s80 = sphi 0, %s77
      %s81 = sphi 0, %s80
      %s97 = sphi 0, %s81
      %s105 = sphi 0, %s107
      %s108 = sphi 0, %s105
      %s109 = sphi 0, %s108
      %s125 = sphi 0, %s109
      %s133 = sphi 0, %s135
      %s136 = sphi 0, %s133
      %s137 = sphi 0, %s136
      %s153 = sphi 0, %s137
    $region4: #{tpu_custom_call.1} parent=1 // loop_header_branch
      %21 = sbr.rel (%p19) target = $region8
    $region5: #{tpu_custom_call.1} parent=1 // loop_body
      %s23 = ssub.s32 %s18, 1
      %s24 = ssub.s32 %s18, 2
      %s34 = sadd.s32 1, %s27
      %p35 = scmp.ge.s32.totalorder %s34, 1
      %s36 = scalar_select %p35, 0, %s34
      %s37 = sadd.s32 1, %s26
      %s38 = scalar_select %p35, %s37, %s26
      %p39 = scmp.ge.s32.totalorder %s38, 1
      %s40 = scalar_select %p39, 0, %s38
      %s41 = sadd.s32 1, %s25
      %s42 = scalar_select %p39, %s41, %s25
      %p43 = scmp.ge.s32.totalorder %s42, 8
      %s44 = scalar_select %p43, 0, %s42
      %s45 = ssub.s32 %s25, %s44
      %s46 = ssub.s32 %s26, %s40
      %s47 = sor.u32 %s45, %s46
      %p48 = scmp.eq.s32.totalorder %s47, 0
      %s50 = sadd.s32 %s49, 1
      %s51 = scalar_select %p48, %s49, %s50
      %p54 = pneg %p48
      %p55 = scmp.eq.s32.totalorder %s18, 7
      %p56 = por %p54, %p55
      %p57 = scmp.ne.s32.totalorder %s49, %s52
      %p58 = scmp.eq.s32.totalorder %s18, 0
      %p59 = por %p57, %p58
      %p60 = scmp.ne.s32.totalorder %s49, %s52
      %p61 = scmp.eq.s32.totalorder %s23, 7
      %p62 = por %p60, %p61
      %p63 = scmp.ne.s32.totalorder %s52, %s53
      %p64 = scmp.eq.s32.totalorder %s23, 0
      %p65 = por %p63, %p64
      %p66 = scmp.ne.s32.totalorder %s52, %s53
      %p67 = scmp.eq.s32.totalorder %s24, 7
      %p68 = por %p66, %p67
      %p70 = scmp.ne.s32.totalorder %s53, %s69
      %p71 = scmp.eq.s32.totalorder %s24, 0
      %p72 = por %p70, %p71
      %s73 = ssub.s32 %s25, %s44
      %s74 = ssub.s32 %s27, %s36
      %s75 = sor.u32 %s73, %s74
      %p76 = scmp.eq.s32.totalorder %s75, 0
      %s78 = sadd.s32 %s77, 1
      %s79 = scalar_select %p76, %s77, %s78
      %p82 = pneg %p76
      %p83 = scmp.eq.s32.totalorder %s18, 7
      %p84 = por %p82, %p83
      %p85 = scmp.ne.s32.totalorder %s77, %s80
      %p86 = scmp.eq.s32.totalorder %s18, 0
      %p87 = por %p85, %p86
      %p88 = scmp.ne.s32.totalorder %s77, %s80
      %p89 = scmp.eq.s32.totalorder %s23, 7
      %p90 = por %p88, %p89
      %p91 = scmp.ne.s32.totalorder %s80, %s81
      %p92 = scmp.eq.s32.totalorder %s23, 0
      %p93 = por %p91, %p92
      %p94 = scmp.ne.s32.totalorder %s80, %s81
      %p95 = scmp.eq.s32.totalorder %s24, 7
      %p96 = por %p94, %p95
      %p98 = scmp.ne.s32.totalorder %s81, %s97
      %p99 = scmp.eq.s32.totalorder %s24, 0
      %p100 = por %p98, %p99
      %s101 = ssub.s32 %s25, %s44
      %s102 = ssub.s32 %s27, %s36
      %s103 = sor.u32 %s101, %s102
      %p104 = scmp.eq.s32.totalorder %s103, 0
      %s106 = sadd.s32 %s105, 1
      %s107 = scalar_select %p104, %s105, %s106
      %p110 = pneg %p104
      %p111 = scmp.eq.s32.totalorder %s18, 7
      %p112 = por %p110, %p111
      %p113 = scmp.ne.s32.totalorder %s105, %s108
      %p114 = scmp.eq.s32.totalorder %s18, 0
      %p115 = por %p113, %p114
      %p116 = scmp.ne.s32.totalorder %s105, %s108
      %p117 = scmp.eq.s32.totalorder %s23, 7
      %p118 = por %p116, %p117
      %p119 = scmp.ne.s32.totalorder %s108, %s109
      %p120 = scmp.eq.s32.totalorder %s23, 0
      %p121 = por %p119, %p120
      %p122 = scmp.ne.s32.totalorder %s108, %s109
      %p123 = scmp.eq.s32.totalorder %s24, 7
      %p124 = por %p122, %p123
      %p126 = scmp.ne.s32.totalorder %s109, %s125
      %p127 = scmp.eq.s32.totalorder %s24, 0
      %p128 = por %p126, %p127
      %s129 = ssub.s32 %s25, %s44
      %s130 = ssub.s32 %s26, %s40
      %s131 = sor.u32 %s129, %s130
      %p132 = scmp.eq.s32.totalorder %s131, 0
      %s134 = sadd.s32 %s133, 1
      %s135 = scalar_select %p132, %s133, %s134
      %p138 = pneg %p132
      %p139 = scmp.eq.s32.totalorder %s18, 7
      %p140 = por %p138, %p139
      %p141 = scmp.ne.s32.totalorder %s133, %s136
      %p142 = scmp.eq.s32.totalorder %s18, 0
      %p143 = por %p141, %p142
      %p144 = scmp.ne.s32.totalorder %s133, %s136
      %p145 = scmp.eq.s32.totalorder %s23, 7
      %p146 = por %p144, %p145
      %p147 = scmp.ne.s32.totalorder %s136, %s137
      %p148 = scmp.eq.s32.totalorder %s23, 0
      %p149 = por %p147, %p148
      %p150 = scmp.ne.s32.totalorder %s136, %s137
      %p151 = scmp.eq.s32.totalorder %s24, 7
      %p152 = por %p150, %p151
      %p154 = scmp.ne.s32.totalorder %s137, %s153
      %p155 = scmp.eq.s32.totalorder %s24, 0
      %p156 = por %p154, %p155
      %p157 = scmp.le.s32.totalorder 1, %s18
      %p158 = scmp.lt.s32.totalorder %s18, 9
      %p159 = pnand %p157, %p158
      %p160 = pneg %p159
      // Predicated region
      $region9: #{tpu_custom_call.1} parent=5 // pred_check
        _
      $region10: #{tpu_custom_call.1} parent=5 // pred_check_branch
        %162 = sbr.rel (%p159) target = $region12
      $region11: #{tpu_custom_call.1} parent=5 // pred_region
        %s163 = ssub.s32 %s18, 1
      $region12: #{tpu_custom_call.1} parent=5 // pred_fallthru
        _
      %p164 = scmp.lt.s32.totalorder %s18, 8
      // Predicated region
      $region13: #{tpu_custom_call.1} parent=5 // pred_check
        %p165 = pneg %p164
      $region14: #{tpu_custom_call.1} parent=5 // pred_check_branch
        %167 = sbr.rel (%p165) target = $region16
      $region15: #{tpu_custom_call.1} parent=5 // pred_region
        // Predicated region
        $region17: #{tpu_custom_call.1} parent=15 // pred_check
          %p168 = pneg %p59
        $region18: #{tpu_custom_call.1} parent=15 // pred_check_branch
          %170 = sbr.rel (%p168) target = $region20
        $region19: #{tpu_custom_call.1} parent=15 // pred_region
          %s171 = sand.u32 %s49, 1
          %s172 = scalar_lea.sflag [#allocation7], %s171
          %s173 = sand.u32 %s49, 1
          %s174 = smul.addr %s173, 128
          %s175 = scalar_lea.vmem [#allocation6], %s174
          %s176 = smul.u32 16, %s26
          %s178 = ssub.s32 2048, 2048
          %179 = vsyncadd %s172, %s178
          %s180 = smul.addr %s25, 16
          %s181 = sadd.s32 %s176, %s180
          %s182 = smul.addr %s181, 128
          %s183 = scalar_lea.hbm %s0, %s182
          %s184 = sshll.u32 %s175, 4
          %s185 = int_to_ptr.vmem [resolvable:$true] %s184
          %190 = dma.hbm_to_vmem [thread:$0]  %s183, 2048, %s185, %s172, 128, 128, 8
        $region20: #{tpu_custom_call.1} parent=15 // pred_fallthru
          _
        // Predicated region
        $region21: #{tpu_custom_call.1} parent=15 // pred_check
          %p191 = pneg %p87
        $region22: #{tpu_custom_call.1} parent=15 // pred_check_branch
          %193 = sbr.rel (%p191) target = $region24
        $region23: #{tpu_custom_call.1} parent=15 // pred_region
          %s194 = sand.u32 %s18, 1
          %s195 = scalar_lea.sflag [#allocation10], %s194
          %s196 = sand.u32 %s77, 1
          %s197 = smul.addr %s196, 128
          %s198 = scalar_lea.vmem [#allocation9], %s197
          %s199 = smul.u32 16, %s27
          %s201 = ssub.s32 2048, 2048
          %202 = vsyncadd %s195, %s201
          %s203 = smul.addr %s25, 16
          %s204 = sadd.s32 %s199, %s203
          %s205 = smul.addr %s204, 128
          %s206 = scalar_lea.hbm %s1, %s205
          %s207 = sshll.u32 %s198, 4
          %s208 = int_to_ptr.vmem [resolvable:$true] %s207
          %213 = dma.hbm_to_vmem [thread:$0]  %s206, 2048, %s208, %s195, 128, 128, 8
        $region24: #{tpu_custom_call.1} parent=15 // pred_fallthru
          _
        // Predicated region
        $region25: #{tpu_custom_call.1} parent=15 // pred_check
          %p214 = pneg %p115
        $region26: #{tpu_custom_call.1} parent=15 // pred_check_branch
          %216 = sbr.rel (%p214) target = $region28
        $region27: #{tpu_custom_call.1} parent=15 // pred_region
          %s217 = sand.u32 %s18, 1
          %s218 = scalar_lea.sflag [#allocation10], %s217
          %s219 = sand.u32 %s105, 1
          %s220 = smul.addr %s219, 128
          %s221 = scalar_lea.vmem [#allocation11], %s220
          %s222 = smul.u32 16, %s27
          %s224 = ssub.s32 2048, 2048
          %225 = vsyncadd %s218, %s224
          %s226 = smul.addr %s25, 16
          %s227 = sadd.s32 %s222, %s226
          %s228 = smul.addr %s227, 128
          %s229 = scalar_lea.hbm %s2, %s228
          %s230 = sshll.u32 %s221, 4
          %s231 = int_to_ptr.vmem [resolvable:$true] %s230
          %236 = dma.hbm_to_vmem [thread:$0]  %s229, 2048, %s231, %s218, 128, 128, 8
        $region28: #{tpu_custom_call.1} parent=15 // pred_fallthru
          _
      $region16: #{tpu_custom_call.1} parent=5 // pred_fallthru
        _
      %p237 = scmp.le.s32.totalorder 1, %s18
      %p238 = scmp.lt.s32.totalorder %s18, 9
      %p239 = pnand %p237, %p238
      %p240 = pneg %p239
      // Predicated region
      $region29: #{tpu_custom_call.1} parent=5 // pred_check
        _
      $region30: #{tpu_custom_call.1} parent=5 // pred_check_branch
        %242 = sbr.rel (%p239) target = $region32
      $region31: #{tpu_custom_call.1} parent=5 // pred_region
        %s243 = ssub.s32 %s18, 1
        %s244 = sand.u32 %s52, 1
        %s245 = scalar_lea.sflag [#allocation7], %s244
        %s246 = sand.u32 %s52, 1
        %s247 = smul.addr %s246, 128
        %s248 = scalar_lea.vmem [#allocation6], %s247
        // Predicated region
        $region33: #{tpu_custom_call.1} parent=31 // pred_check
          %p249 = pneg %p65
        $region34: #{tpu_custom_call.1} parent=31 // pred_check_branch
          %251 = sbr.rel (%p249) target = $region36
        $region35: #{tpu_custom_call.1} parent=31 // pred_region
          %252 = dma.done %s245, 2048
        $region36: #{tpu_custom_call.1} parent=31 // pred_fallthru
          _
        %s253 = sand.u32 %s23, 1
        %s254 = scalar_lea.sflag [#allocation10], %s253
        %s255 = sand.u32 %s80, 1
        %s256 = smul.addr %s255, 128
        %s257 = scalar_lea.vmem [#allocation9], %s256
        // Predicated region
        $region37: #{tpu_custom_call.1} parent=31 // pred_check
          %p258 = pneg %p93
        $region38: #{tpu_custom_call.1} parent=31 // pred_check_branch
          %260 = sbr.rel (%p258) target = $region40
        $region39: #{tpu_custom_call.1} parent=31 // pred_region
          %261 = dma.done %s254, 2048
        $region40: #{tpu_custom_call.1} parent=31 // pred_fallthru
          _
        %s262 = sand.u32 %s23, 1
        %s263 = scalar_lea.sflag [#allocation10], %s262
        %s264 = sand.u32 %s108, 1
        %s265 = smul.addr %s264, 128
        %s266 = scalar_lea.vmem [#allocation11], %s265
        // Predicated region
        $region41: #{tpu_custom_call.1} parent=31 // pred_check
          %p267 = pneg %p121
        $region42: #{tpu_custom_call.1} parent=31 // pred_check_branch
          %269 = sbr.rel (%p267) target = $region44
        $region43: #{tpu_custom_call.1} parent=31 // pred_region
          %270 = dma.done %s263, 2048
        $region44: #{tpu_custom_call.1} parent=31 // pred_fallthru
          _
        %s271 = sand.u32 %s52, 1
        %s272 = scalar_lea.sflag [#allocation7], %s271
        %s273 = sand.u32 %s52, 1
        %s274 = smul.addr %s273, 128
        %s275 = scalar_lea.vmem [#allocation6], %s274
        %p276 = pneg %p65
        %p277 = pneg %p62
        %s278 = sand.u32 %s23, 1
        %s279 = scalar_lea.sflag [#allocation10], %s278
        %s280 = sand.u32 %s80, 1
        %s281 = smul.addr %s280, 128
        %s282 = scalar_lea.vmem [#allocation9], %s281
        %p283 = pneg %p93
        %p284 = pneg %p90
        %s285 = sand.u32 %s23, 1
        %s286 = scalar_lea.sflag [#allocation10], %s285
        %s287 = sand.u32 %s108, 1
        %s288 = smul.addr %s287, 128
        %s289 = scalar_lea.vmem [#allocation11], %s288
        %p290 = pneg %p121
        %p291 = pneg %p118
        %p292 = pneg %p149
        %p293 = pneg %p146
        %s294 = sand.u32 %s136, 1
        %s295 = scalar_lea.sflag [#allocation8], %s294
        %s296 = sand.u32 %s136, 1
        %s297 = smul.addr %s296, 128
        %s298 = scalar_lea.vmem [#allocation12], %s297
        %s299 = smul.u32 16, %s29
        %s300 = smul.u32 16, %s30
        %s301 = smul.u32 16, %s30
        %s302 = smul.u32 16, %s29
        %p303 = scmp.eq.s32.totalorder %s30, 0
        // Predicated region
        $region45: #{tpu_custom_call.1} parent=31 // pred_check
          %p304 = pneg %p303
        $region46: #{tpu_custom_call.1} parent=31 // pred_check_branch
          %306 = sbr.rel (%p304) target = $region48
        $region47: #{tpu_custom_call.1} parent=31 // pred_region
          %vm307 = vcmask 7168
          %308 = vst.msk [vmem:[#allocation3] sm:$0xff] %vm307, -1e+30
          %309 = vst.msk [vmem:[#allocation3 + $0x8] sm:$0xff] %vm307, -1e+30
          %310 = vst.msk [vmem:[#allocation3 + $0x10] sm:$0xff] %vm307, -1e+30
          %311 = vst.msk [vmem:[#allocation3 + $0x18] sm:$0xff] %vm307, -1e+30
          %312 = vst.msk [vmem:[#allocation3 + $0x20] sm:$0xff] %vm307, -1e+30
          %313 = vst.msk [vmem:[#allocation3 + $0x28] sm:$0xff] %vm307, -1e+30
          %314 = vst.msk [vmem:[#allocation3 + $0x30] sm:$0xff] %vm307, -1e+30
          %315 = vst.msk [vmem:[#allocation3 + $0x38] sm:$0xff] %vm307, -1e+30
          %316 = vst.msk [vmem:[#allocation3 + $0x40] sm:$0xff] %vm307, -1e+30
          %317 = vst.msk [vmem:[#allocation3 + $0x48] sm:$0xff] %vm307, -1e+30
          %318 = vst.msk [vmem:[#allocation3 + $0x50] sm:$0xff] %vm307, -1e+30
          %319 = vst.msk [vmem:[#allocation3 + $0x58] sm:$0xff] %vm307, -1e+30
          %320 = vst.msk [vmem:[#allocation3 + $0x60] sm:$0xff] %vm307, -1e+30
          %321 = vst.msk [vmem:[#allocation3 + $0x68] sm:$0xff] %vm307, -1e+30
          %322 = vst.msk [vmem:[#allocation3 + $0x70] sm:$0xff] %vm307, -1e+30
          %323 = vst.msk [vmem:[#allocation3 + $0x78] sm:$0xff] %vm307, -1e+30
          %324 = vst.msk [vmem:[#allocation4] sm:$0xff] %vm307, 0.0
          %325 = vst.msk [vmem:[#allocation4 + $0x8] sm:$0xff] %vm307, 0.0
          %326 = vst.msk [vmem:[#allocation4 + $0x10] sm:$0xff] %vm307, 0.0
          %327 = vst.msk [vmem:[#allocation4 + $0x18] sm:$0xff] %vm307, 0.0
          %328 = vst.msk [vmem:[#allocation4 + $0x20] sm:$0xff] %vm307, 0.0
          %329 = vst.msk [vmem:[#allocation4 + $0x28] sm:$0xff] %vm307, 0.0
          %330 = vst.msk [vmem:[#allocation4 + $0x30] sm:$0xff] %vm307, 0.0
          %331 = vst.msk [vmem:[#allocation4 + $0x38] sm:$0xff] %vm307, 0.0
          %332 = vst.msk [vmem:[#allocation4 + $0x40] sm:$0xff] %vm307, 0.0
          %333 = vst.msk [vmem:[#allocation4 + $0x48] sm:$0xff] %vm307, 0.0
          %334 = vst.msk [vmem:[#allocation4 + $0x50] sm:$0xff] %vm307, 0.0
          %335 = vst.msk [vmem:[#allocation4 + $0x58] sm:$0xff] %vm307, 0.0
          %336 = vst.msk [vmem:[#allocation4 + $0x60] sm:$0xff] %vm307, 0.0
          %337 = vst.msk [vmem:[#allocation4 + $0x68] sm:$0xff] %vm307, 0.0
          %338 = vst.msk [vmem:[#allocation4 + $0x70] sm:$0xff] %vm307, 0.0
          %339 = vst.msk [vmem:[#allocation4 + $0x78] sm:$0xff] %vm307, 0.0
          %340 = vst [vmem:[#allocation5] sm:$0xff] 0.0
          %341 = vst [vmem:[#allocation5 + $0x8] sm:$0xff] 0.0
          %342 = vst [vmem:[#allocation5 + $0x10] sm:$0xff] 0.0
          %343 = vst [vmem:[#allocation5 + $0x18] sm:$0xff] 0.0
          %344 = vst [vmem:[#allocation5 + $0x20] sm:$0xff] 0.0
          %345 = vst [vmem:[#allocation5 + $0x28] sm:$0xff] 0.0
          %346 = vst [vmem:[#allocation5 + $0x30] sm:$0xff] 0.0
          %347 = vst [vmem:[#allocation5 + $0x38] sm:$0xff] 0.0
          %348 = vst [vmem:[#allocation5 + $0x40] sm:$0xff] 0.0
          %349 = vst [vmem:[#allocation5 + $0x48] sm:$0xff] 0.0
          %350 = vst [vmem:[#allocation5 + $0x50] sm:$0xff] 0.0
          %351 = vst [vmem:[#allocation5 + $0x58] sm:$0xff] 0.0
          %352 = vst [vmem:[#allocation5 + $0x60] sm:$0xff] 0.0
          %353 = vst [vmem:[#allocation5 + $0x68] sm:$0xff] 0.0
          %354 = vst [vmem:[#allocation5 + $0x70] sm:$0xff] 0.0
          %355 = vst [vmem:[#allocation5 + $0x78] sm:$0xff] 0.0
          %v356 = vld [vmem:[%s248] sm:$0xff]
          %v357 = vld [vmem:[%s248 + $0x8] sm:$0xff]
          %v358 = vld [vmem:[%s248 + $0x10] sm:$0xff]
          %v359 = vld [vmem:[%s248 + $0x18] sm:$0xff]
          %v360 = vld [vmem:[%s248 + $0x20] sm:$0xff]
          %v361 = vld [vmem:[%s248 + $0x28] sm:$0xff]
          %v362 = vld [vmem:[%s248 + $0x30] sm:$0xff]
          %v363 = vld [vmem:[%s248 + $0x38] sm:$0xff]
          %v364 = vld [vmem:[%s248 + $0x40] sm:$0xff]
          %v365 = vld [vmem:[%s248 + $0x48] sm:$0xff]
          %v366 = vld [vmem:[%s248 + $0x50] sm:$0xff]
          %v367 = vld [vmem:[%s248 + $0x58] sm:$0xff]
          %v368 = vld [vmem:[%s248 + $0x60] sm:$0xff]
          %v369 = vld [vmem:[%s248 + $0x68] sm:$0xff]
          %v370 = vld [vmem:[%s248 + $0x70] sm:$0xff]
          %v371 = vld [vmem:[%s248 + $0x78] sm:$0xff]
          %v372 = vmul.f32 %v356, 0.17677669
          %v373 = vmul.f32 %v357, 0.17677669
          %v374 = vmul.f32 %v358, 0.17677669
          %v375 = vmul.f32 %v359, 0.17677669
          %v376 = vmul.f32 %v360, 0.17677669
          %v377 = vmul.f32 %v361, 0.17677669
          %v378 = vmul.f32 %v362, 0.17677669
          %v379 = vmul.f32 %v363, 0.17677669
          %v380 = vmul.f32 %v364, 0.17677669
          %v381 = vmul.f32 %v365, 0.17677669
          %v382 = vmul.f32 %v366, 0.17677669
          %v383 = vmul.f32 %v367, 0.17677669
          %v384 = vmul.f32 %v368, 0.17677669
          %v385 = vmul.f32 %v369, 0.17677669
          %v386 = vmul.f32 %v370, 0.17677669
          %v387 = vmul.f32 %v371, 0.17677669
          %388 = vst [vmem:[#allocation2] sm:$0xff] %v372
          %389 = vst [vmem:[#allocation2 + $0x8] sm:$0xff] %v373
          %390 = vst [vmem:[#allocation2 + $0x10] sm:$0xff] %v374
          %391 = vst [vmem:[#allocation2 + $0x18] sm:$0xff] %v375
          %392 = vst [vmem:[#allocation2 + $0x20] sm:$0xff] %v376
          %393 = vst [vmem:[#allocation2 + $0x28] sm:$0xff] %v377
          %394 = vst [vmem:[#allocation2 + $0x30] sm:$0xff] %v378
          %395 = vst [vmem:[#allocation2 + $0x38] sm:$0xff] %v379
          %396 = vst [vmem:[#allocation2 + $0x40] sm:$0xff] %v380
          %397 = vst [vmem:[#allocation2 + $0x48] sm:$0xff] %v381
          %398 = vst [vmem:[#allocation2 + $0x50] sm:$0xff] %v382
          %399 = vst [vmem:[#allocation2 + $0x58] sm:$0xff] %v383
          %400 = vst [vmem:[#allocation2 + $0x60] sm:$0xff] %v384
          %401 = vst [vmem:[#allocation2 + $0x68] sm:$0xff] %v385
          %402 = vst [vmem:[#allocation2 + $0x70] sm:$0xff] %v386
          %403 = vst [vmem:[#allocation2 + $0x78] sm:$0xff] %v387
        $region48: #{tpu_custom_call.1} parent=31 // pred_fallthru
          _
        %v404 = vld [vmem:[#allocation2] sm:$0xff]
        %v405 = vld [vmem:[#allocation2 + $0x8] sm:$0xff]
        %v406 = vld [vmem:[#allocation2 + $0x10] sm:$0xff]
        %v407 = vld [vmem:[#allocation2 + $0x18] sm:$0xff]
        %v408 = vld [vmem:[#allocation2 + $0x20] sm:$0xff]
        %v409 = vld [vmem:[#allocation2 + $0x28] sm:$0xff]
        %v410 = vld [vmem:[#allocation2 + $0x30] sm:$0xff]
        %v411 = vld [vmem:[#allocation2 + $0x38] sm:$0xff]
        %v412 = vld [vmem:[#allocation2 + $0x40] sm:$0xff]
        %v413 = vld [vmem:[#allocation2 + $0x48] sm:$0xff]
        %v414 = vld [vmem:[#allocation2 + $0x50] sm:$0xff]
        %v415 = vld [vmem:[#allocation2 + $0x58] sm:$0xff]
        %v416 = vld [vmem:[#allocation2 + $0x60] sm:$0xff]
        %v417 = vld [vmem:[#allocation2 + $0x68] sm:$0xff]
        %v418 = vld [vmem:[#allocation2 + $0x70] sm:$0xff]
        %v419 = vld [vmem:[#allocation2 + $0x78] sm:$0xff]
        %v420 = vld [vmem:[%s257] sm:$0xff]
        %v421 = vld [vmem:[%s257 + $0x8] sm:$0xff]
        %v422 = vld [vmem:[%s257 + $0x10] sm:$0xff]
        %v423 = vld [vmem:[%s257 + $0x18] sm:$0xff]
        %v424 = vld [vmem:[%s257 + $0x20] sm:$0xff]
        %v425 = vld [vmem:[%s257 + $0x28] sm:$0xff]
        %v426 = vld [vmem:[%s257 + $0x30] sm:$0xff]
        %v427 = vld [vmem:[%s257 + $0x38] sm:$0xff]
        %v428 = vld [vmem:[%s257 + $0x40] sm:$0xff]
        %v429 = vld [vmem:[%s257 + $0x48] sm:$0xff]
        %v430 = vld [vmem:[%s257 + $0x50] sm:$0xff]
        %v431 = vld [vmem:[%s257 + $0x58] sm:$0xff]
        %v432 = vld [vmem:[%s257 + $0x60] sm:$0xff]
        %v433 = vld [vmem:[%s257 + $0x68] sm:$0xff]
        %v434 = vld [vmem:[%s257 + $0x70] sm:$0xff]
        %v435 = vld [vmem:[%s257 + $0x78] sm:$0xff]
        %v436 = vld [vmem:[%s266] sm:$0xff]
        %v437 = vld [vmem:[%s266 + $0x8] sm:$0xff]
        %v438 = vld [vmem:[%s266 + $0x10] sm:$0xff]
        %v439 = vld [vmem:[%s266 + $0x18] sm:$0xff]
        %v440 = vld [vmem:[%s266 + $0x20] sm:$0xff]
        %v441 = vld [vmem:[%s266 + $0x28] sm:$0xff]
        %v442 = vld [vmem:[%s266 + $0x30] sm:$0xff]
        %v443 = vld [vmem:[%s266 + $0x38] sm:$0xff]
        %v444 = vld [vmem:[%s266 + $0x40] sm:$0xff]
        %v445 = vld [vmem:[%s266 + $0x48] sm:$0xff]
        %v446 = vld [vmem:[%s266 + $0x50] sm:$0xff]
        %v447 = vld [vmem:[%s266 + $0x58] sm:$0xff]
        %v448 = vld [vmem:[%s266 + $0x60] sm:$0xff]
        %v449 = vld [vmem:[%s266 + $0x68] sm:$0xff]
        %v450 = vld [vmem:[%s266 + $0x70] sm:$0xff]
        %v451 = vld [vmem:[%s266 + $0x78] sm:$0xff]
        %452 = vmatprep.subr.mxu0 0.0
        %453 = vmatpush1.xpose.msra.mxu0 %v420
        %454 = vmatprep.subr.mxu0 0.0
        %455 = vmatpush1.xpose.msra.mxu0 %v421
        %456 = vmatprep.subr.mxu0 0.0
        %457 = vmatpush1.xpose.msra.mxu0 %v422
        %458 = vmatprep.subr.mxu0 0.0
        %459 = vmatpush1.xpose.msra.mxu0 %v423
        %460 = vmatprep.subr.mxu0 0.0
        %461 = vmatpush1.xpose.msra.mxu0 %v424
        %462 = vmatprep.subr.mxu0 0.0
        %463 = vmatpush1.xpose.msra.mxu0 %v425
        %464 = vmatprep.subr.mxu0 0.0
        %465 = vmatpush1.xpose.msra.mxu0 %v426
        %466 = vmatprep.subr.mxu0 0.0
        %467 = vmatpush1.xpose.msra.mxu0 %v427
        %468 = vmatprep.subr.mxu0 0.0
        %469 = vmatpush1.xpose.msra.mxu0 %v428
        %470 = vmatprep.subr.mxu0 0.0
        %471 = vmatpush1.xpose.msra.mxu0 %v429
        %472 = vmatprep.subr.mxu0 0.0
        %473 = vmatpush1.xpose.msra.mxu0 %v430
        %474 = vmatprep.subr.mxu0 0.0
        %475 = vmatpush1.xpose.msra.mxu0 %v431
        %476 = vmatprep.subr.mxu0 0.0
        %477 = vmatpush1.xpose.msra.mxu0 %v432
        %478 = vmatprep.subr.mxu0 0.0
        %479 = vmatpush1.xpose.msra.mxu0 %v433
        %480 = vmatprep.subr.mxu0 0.0
        %481 = vmatpush1.xpose.msra.mxu0 %v434
        %482 = vmatprep.subr.mxu0 0.0
        %483 = vmatpush1.xpose.msra.mxu0 %v435
        %484 = vmatprep.subr.mxu0 0.0
        %485 = vmatpush1.xpose.msra.mxu0 0.0
        %486 = vmatprep.subr.mxu0 0.0
        %487 = vmatpush1.xpose.msra.mxu0 0.0
        %488 = vmatprep.subr.mxu0 0.0
        %489 = vmatpush1.xpose.msra.mxu0 0.0
        %490 = vmatprep.subr.mxu0 0.0
        %491 = vmatpush1.xpose.msra.mxu0 0.0
        %492 = vmatprep.subr.mxu0 0.0
        %493 = vmatpush1.xpose.msra.mxu0 0.0
        %494 = vmatprep.subr.mxu0 0.0
        %495 = vmatpush1.xpose.msra.mxu0 0.0
        %496 = vmatprep.subr.mxu0 0.0
        %497 = vmatpush1.xpose.msra.mxu0 0.0
        %498 = vmatprep.subr.mxu0 0.0
        %499 = vmatpush1.xpose.msra.mxu0 0.0
        %500 = vmatprep.subr.mxu0 0.0
        %501 = vmatpush1.xpose.msra.mxu0 0.0
        %502 = vmatprep.subr.mxu0 0.0
        %503 = vmatpush1.xpose.msra.mxu0 0.0
        %504 = vmatprep.subr.mxu0 0.0
        %505 = vmatpush1.xpose.msra.mxu0 0.0
        %506 = vmatprep.subr.mxu0 0.0
        %507 = vmatpush1.xpose.msra.mxu0 0.0
        %508 = vmatprep.subr.mxu0 0.0
        %509 = vmatpush1.xpose.msra.mxu0 0.0
        %510 = vmatprep.subr.mxu0 0.0
        %511 = vmatpush1.xpose.msra.mxu0 0.0
        %512 = vmatprep.subr.mxu0 0.0
        %513 = vmatpush1.xpose.msra.mxu0 0.0
        %514 = vmatprep.subr.mxu0 0.0
        %515 = vmatpush1.xpose.msra.mxu0 0.0
        %516 = vmatprep.mubr.f32.mxu0 0.0
        %517 = vmatmul.mubr.f32.gmra.mrb[0].mxu0 %v404
        %v518 = vpop.f32.mrb[0].mxu0
        %v519 = vadd.f32 0.0, %v518
        %v520 = vpop.f32.mrb[0].mxu0
        %521 = vmatprep.mubr.f32.mxu0 0.0
        %522 = vmatmul.mubr.f32.gmra.mrb[0].mxu0 %v405
        %v523 = vpop.f32.mrb[0].mxu0
        %v524 = vadd.f32 0.0, %v523
        %v525 = vpop.f32.mrb[0].mxu0
        %526 = vmatprep.mubr.f32.mxu0 0.0
        %527 = vmatmul.mubr.f32.gmra.mrb[0].mxu0 %v406
        %v528 = vpop.f32.mrb[0].mxu0
        %v529 = vadd.f32 0.0, %v528
        %v530 = vpop.f32.mrb[0].mxu0
        %531 = vmatprep.mubr.f32.mxu0 0.0
        %532 = vmatmul.mubr.f32.gmra.mrb[0].mxu0 %v407
        %v533 = vpop.f32.mrb[0].mxu0
        %v534 = vadd.f32 0.0, %v533
        %v535 = vpop.f32.mrb[0].mxu0
        %536 = vmatprep.mubr.f32.mxu0 0.0
        %537 = vmatmul.mubr.f32.gmra.mrb[0].mxu0 %v408
        %v538 = vpop.f32.mrb[0].mxu0
        %v539 = vadd.f32 0.0, %v538
        %v540 = vpop.f32.mrb[0].mxu0
        %541 = vmatprep.mubr.f32.mxu0 0.0
        %542 = vmatmul.mubr.f32.gmra.mrb[0].mxu0 %v409
        %v543 = vpop.f32.mrb[0].mxu0
        %v544 = vadd.f32 0.0, %v543
        %v545 = vpop.f32.mrb[0].mxu0
        %546 = vmatprep.mubr.f32.mxu0 0.0
        %547 = vmatmul.mubr.f32.gmra.mrb[0].mxu0 %v410
        %v548 = vpop.f32.mrb[0].mxu0
        %v549 = vadd.f32 0.0, %v548
        %v550 = vpop.f32.mrb[0].mxu0
        %551 = vmatprep.mubr.f32.mxu0 0.0
        %552 = vmatmul.mubr.f32.gmra.mrb[0].mxu0 %v411
        %v553 = vpop.f32.mrb[0].mxu0
        %v554 = vadd.f32 0.0, %v553
        %v555 = vpop.f32.mrb[0].mxu0
        %556 = vmatprep.mubr.f32.mxu0 0.0
        %557 = vmatmul.mubr.f32.gmra.mrb[0].mxu0 %v412
        %v558 = vpop.f32.mrb[0].mxu0
        %v559 = vadd.f32 0.0, %v558
        %v560 = vpop.f32.mrb[0].mxu0
        %561 = vmatprep.mubr.f32.mxu0 0.0
        %562 = vmatmul.mubr.f32.gmra.mrb[0].mxu0 %v413
        %v563 = vpop.f32.mrb[0].mxu0
        %v564 = vadd.f32 0.0, %v563
        %v565 = vpop.f32.mrb[0].mxu0
        %566 = vmatprep.mubr.f32.mxu0 0.0
        %567 = vmatmul.mubr.f32.gmra.mrb[0].mxu0 %v414
        %v568 = vpop.f32.mrb[0].mxu0
        %v569 = vadd.f32 0.0, %v568
        %v570 = vpop.f32.mrb[0].mxu0
        %571 = vmatprep.mubr.f32.mxu0 0.0
        %572 = vmatmul.mubr.f32.gmra.mrb[0].mxu0 %v415
        %v573 = vpop.f32.mrb[0].mxu0
        %v574 = vadd.f32 0.0, %v573
        %v575 = vpop.f32.mrb[0].mxu0
        %576 = vmatprep.mubr.f32.mxu0 0.0
        %577 = vmatmul.mubr.f32.gmra.mrb[0].mxu0 %v416
        %v578 = vpop.f32.mrb[0].mxu0
        %v579 = vadd.f32 0.0, %v578
        %v580 = vpop.f32.mrb[0].mxu0
        %581 = vmatprep.mubr.f32.mxu0 0.0
        %582 = vmatmul.mubr.f32.gmra.mrb[0].mxu0 %v417
        %v583 = vpop.f32.mrb[0].mxu0
        %v584 = vadd.f32 0.0, %v583
        %v585 = vpop.f32.mrb[0].mxu0
        %586 = vmatprep.mubr.f32.mxu0 0.0
        %587 = vmatmul.mubr.f32.gmra.mrb[0].mxu0 %v418
        %v588 = vpop.f32.mrb[0].mxu0
        %v589 = vadd.f32 0.0, %v588
        %v590 = vpop.f32.mrb[0].mxu0
        %591 = vmatprep.mubr.f32.mxu0 0.0
        %592 = vmatmul.mubr.f32.gmra.mrb[0].mxu0 %v419
        %v593 = vpop.f32.mrb[0].mxu0
        %v594 = vadd.f32 0.0, %v593
        %v595 = vpop.f32.mrb[0].mxu0
        %596 = vdwg.mxu0
        %s597 = smul.u32 %s30, 128
        %v598 = vlaneseq
        %v599 = vand.u32 %v598, 127
        %v600 = vstv %s597
        %v601 = vadd.s32 %v600, %v599
        %vm602 = vcmp.lt.s32.totalorder %v601, 8
        %v603 = vsel %vm602, %v519, -1e+30
        %v604 = vsel %vm602, %v524, -1e+30
        %v605 = vsel %vm602, %v529, -1e+30
        %v606 = vsel %vm602, %v534, -1e+30
        %v607 = vsel %vm602, %v539, -1e+30
        %v608 = vsel %vm602, %v544, -1e+30
        %v609 = vsel %vm602, %v549, -1e+30
        %v610 = vsel %vm602, %v554, -1e+30
        %v611 = vsel %vm602, %v559, -1e+30
        %v612 = vsel %vm602, %v564, -1e+30
        %v613 = vsel %vm602, %v569, -1e+30
        %v614 = vsel %vm602, %v574, -1e+30
        %v615 = vsel %vm602, %v579, -1e+30
        %v616 = vsel %vm602, %v584, -1e+30
        %v617 = vsel %vm602, %v589, -1e+30
        %v618 = vsel %vm602, %v594, -1e+30
        %v619 = vld [vmem:[#allocation3] sm:$0xff]
        %v620 = vld [vmem:[#allocation3 + $0x8] sm:$0xff]
        %v621 = vld [vmem:[#allocation3 + $0x10] sm:$0xff]
        %v622 = vld [vmem:[#allocation3 + $0x18] sm:$0xff]
        %v623 = vld [vmem:[#allocation3 + $0x20] sm:$0xff]
        %v624 = vld [vmem:[#allocation3 + $0x28] sm:$0xff]
        %v625 = vld [vmem:[#allocation3 + $0x30] sm:$0xff]
        %v626 = vld [vmem:[#allocation3 + $0x38] sm:$0xff]
        %v627 = vld [vmem:[#allocation3 + $0x40] sm:$0xff]
        %v628 = vld [vmem:[#allocation3 + $0x48] sm:$0xff]
        %v629 = vld [vmem:[#allocation3 + $0x50] sm:$0xff]
        %v630 = vld [vmem:[#allocation3 + $0x58] sm:$0xff]
        %v631 = vld [vmem:[#allocation3 + $0x60] sm:$0xff]
        %v632 = vld [vmem:[#allocation3 + $0x68] sm:$0xff]
        %v633 = vld [vmem:[#allocation3 + $0x70] sm:$0xff]
        %v634 = vld [vmem:[#allocation3 + $0x78] sm:$0xff]
        %635 = vmax.xlane.f32.xlu0 %v603
        %v636 = vpop.xlane.xlu0 %635
        %637 = vmax.xlane.f32.xlu0 %v604
        %v638 = vpop.xlane.xlu0 %637
        %639 = vmax.xlane.f32.xlu0 %v605
        %v640 = vpop.xlane.xlu0 %639
        %641 = vmax.xlane.f32.xlu0 %v606
        %v642 = vpop.xlane.xlu0 %641
        %643 = vmax.xlane.f32.xlu0 %v607
        %v644 = vpop.xlane.xlu0 %643
        %645 = vmax.xlane.f32.xlu0 %v608
        %v646 = vpop.xlane.xlu0 %645
        %647 = vmax.xlane.f32.xlu0 %v609
        %v648 = vpop.xlane.xlu0 %647
        %649 = vmax.xlane.f32.xlu0 %v610
        %v650 = vpop.xlane.xlu0 %649
        %651 = vmax.xlane.f32.xlu0 %v611
        %v652 = vpop.xlane.xlu0 %651
        %653 = vmax.xlane.f32.xlu0 %v612
        %v654 = vpop.xlane.xlu0 %653
        %655 = vmax.xlane.f32.xlu0 %v613
        %v656 = vpop.xlane.xlu0 %655
        %657 = vmax.xlane.f32.xlu0 %v614
        %v658 = vpop.xlane.xlu0 %657
        %659 = vmax.xlane.f32.xlu0 %v615
        %v660 = vpop.xlane.xlu0 %659
        %661 = vmax.xlane.f32.xlu0 %v616
        %v662 = vpop.xlane.xlu0 %661
        %663 = vmax.xlane.f32.xlu0 %v617
        %v664 = vpop.xlane.xlu0 %663
        %665 = vmax.xlane.f32.xlu0 %v618
        %v666 = vpop.xlane.xlu0 %665
        %v667 = vmax.f32 %v619, %v636
        %v668 = vmax.f32 %v620, %v638
        %v669 = vmax.f32 %v621, %v640
        %v670 = vmax.f32 %v622, %v642
        %v671 = vmax.f32 %v623, %v644
        %v672 = vmax.f32 %v624, %v646
        %v673 = vmax.f32 %v625, %v648
        %v674 = vmax.f32 %v626, %v650
        %v675 = vmax.f32 %v627, %v652
        %v676 = vmax.f32 %v628, %v654
        %v677 = vmax.f32 %v629, %v656
        %v678 = vmax.f32 %v630, %v658
        %v679 = vmax.f32 %v631, %v660
        %v680 = vmax.f32 %v632, %v662
        %v681 = vmax.f32 %v633, %v664
        %v682 = vmax.f32 %v634, %v666
        %v683 = vsub.f32 %v619, %v667
        %v684 = vsub.f32 %v620, %v668
        %v685 = vsub.f32 %v621, %v669
        %v686 = vsub.f32 %v622, %v670
        %v687 = vsub.f32 %v623, %v671
        %v688 = vsub.f32 %v624, %v672
        %v689 = vsub.f32 %v625, %v673
        %v690 = vsub.f32 %v626, %v674
        %v691 = vsub.f32 %v627, %v675
        %v692 = vsub.f32 %v628, %v676
        %v693 = vsub.f32 %v629, %v677
        %v694 = vsub.f32 %v630, %v678
        %v695 = vsub.f32 %v631, %v679
        %v696 = vsub.f32 %v632, %v680
        %v697 = vsub.f32 %v633, %v681
        %v698 = vsub.f32 %v634, %v682
        %v699 = vmul.f32 %v683, 1.442695
        %v700 = vpow.pop %v699
        %v701 = vmul.f32 %v684, 1.442695
        %v702 = vpow.pop %v701
        %v703 = vmul.f32 %v685, 1.442695
        %v704 = vpow.pop %v703
        %v705 = vmul.f32 %v686, 1.442695
        %v706 = vpow.pop %v705
        %v707 = vmul.f32 %v687, 1.442695
        %v708 = vpow.pop %v707
        %v709 = vmul.f32 %v688, 1.442695
        %v710 = vpow.pop %v709
        %v711 = vmul.f32 %v689, 1.442695
        %v712 = vpow.pop %v711
        %v713 = vmul.f32 %v690, 1.442695
        %v714 = vpow.pop %v713
        %v715 = vmul.f32 %v691, 1.442695
        %v716 = vpow.pop %v715
        %v717 = vmul.f32 %v692, 1.442695
        %v718 = vpow.pop %v717
        %v719 = vmul.f32 %v693, 1.442695
        %v720 = vpow.pop %v719
        %v721 = vmul.f32 %v694, 1.442695
        %v722 = vpow.pop %v721
        %v723 = vmul.f32 %v695, 1.442695
        %v724 = vpow.pop %v723
        %v725 = vmul.f32 %v696, 1.442695
        %v726 = vpow.pop %v725
        %v727 = vmul.f32 %v697, 1.442695
        %v728 = vpow.pop %v727
        %v729 = vmul.f32 %v698, 1.442695
        %v730 = vpow.pop %v729
        %732 = vset.pattern.permute.xlu0 0
        %733 = vperm.xlu0 %732, %v667
        %v734 = vpop.permute.xlu0 %733
        %737 = vset.pattern.permute.xlu0 0
        %738 = vperm.xlu0 %737, %v668
        %v739 = vpop.permute.xlu0 %738
        %742 = vset.pattern.permute.xlu0 0
        %743 = vperm.xlu0 %742, %v669
        %v744 = vpop.permute.xlu0 %743
        %747 = vset.pattern.permute.xlu0 0
        %748 = vperm.xlu0 %747, %v670
        %v749 = vpop.permute.xlu0 %748
        %752 = vset.pattern.permute.xlu0 0
        %753 = vperm.xlu0 %752, %v671
        %v754 = vpop.permute.xlu0 %753
        %757 = vset.pattern.permute.xlu0 0
        %758 = vperm.xlu0 %757, %v672
        %v759 = vpop.permute.xlu0 %758
        %762 = vset.pattern.permute.xlu0 0
        %763 = vperm.xlu0 %762, %v673
        %v764 = vpop.permute.xlu0 %763
        %767 = vset.pattern.permute.xlu0 0
        %768 = vperm.xlu0 %767, %v674
        %v769 = vpop.permute.xlu0 %768
        %772 = vset.pattern.permute.xlu0 0
        %773 = vperm.xlu0 %772, %v675
        %v774 = vpop.permute.xlu0 %773
        %777 = vset.pattern.permute.xlu0 0
        %778 = vperm.xlu0 %777, %v676
        %v779 = vpop.permute.xlu0 %778
        %782 = vset.pattern.permute.xlu0 0
        %783 = vperm.xlu0 %782, %v677
        %v784 = vpop.permute.xlu0 %783
        %787 = vset.pattern.permute.xlu0 0
        %788 = vperm.xlu0 %787, %v678
        %v789 = vpop.permute.xlu0 %788
        %792 = vset.pattern.permute.xlu0 0
        %793 = vperm.xlu0 %792, %v679
        %v794 = vpop.permute.xlu0 %793
        %797 = vset.pattern.permute.xlu0 0
        %798 = vperm.xlu0 %797, %v680
        %v799 = vpop.permute.xlu0 %798
        %802 = vset.pattern.permute.xlu0 0
        %803 = vperm.xlu0 %802, %v681
        %v804 = vpop.permute.xlu0 %803
        %807 = vset.pattern.permute.xlu0 0
        %808 = vperm.xlu0 %807, %v682
        %v809 = vpop.permute.xlu0 %808
        %v811 = vsub.f32 %v603, %v734
        %v812 = vsub.f32 %v604, %v739
        %v813 = vsub.f32 %v605, %v744
        %v814 = vsub.f32 %v606, %v749
        %v815 = vsub.f32 %v607, %v754
        %v816 = vsub.f32 %v608, %v759
        %v817 = vsub.f32 %v609, %v764
        %v818 = vsub.f32 %v610, %v769
        %v819 = vsub.f32 %v611, %v774
        %v820 = vsub.f32 %v612, %v779
        %v821 = vsub.f32 %v613, %v784
        %v822 = vsub.f32 %v614, %v789
        %v823 = vsub.f32 %v615, %v794
        %v824 = vsub.f32 %v616, %v799
        %v825 = vsub.f32 %v617, %v804
        %v826 = vsub.f32 %v618, %v809
        %v827 = vmul.f32 %v811, 1.442695
        %v828 = vpow.pop %v827
        %v829 = vmul.f32 %v812, 1.442695
        %v830 = vpow.pop %v829
        %v831 = vmul.f32 %v813, 1.442695
        %v832 = vpow.pop %v831
        %v833 = vmul.f32 %v814, 1.442695
        %v834 = vpow.pop %v833
        %v835 = vmul.f32 %v815, 1.442695
        %v836 = vpow.pop %v835
        %v837 = vmul.f32 %v816, 1.442695
        %v838 = vpow.pop %v837
        %v839 = vmul.f32 %v817, 1.442695
        %v840 = vpow.pop %v839
        %v841 = vmul.f32 %v818, 1.442695
        %v842 = vpow.pop %v841
        %v843 = vmul.f32 %v819, 1.442695
        %v844 = vpow.pop %v843
        %v845 = vmul.f32 %v820, 1.442695
        %v846 = vpow.pop %v845
        %v847 = vmul.f32 %v821, 1.442695
        %v848 = vpow.pop %v847
        %v849 = vmul.f32 %v822, 1.442695
        %v850 = vpow.pop %v849
        %v851 = vmul.f32 %v823, 1.442695
        %v852 = vpow.pop %v851
        %v853 = vmul.f32 %v824, 1.442695
        %v854 = vpow.pop %v853
        %v855 = vmul.f32 %v825, 1.442695
        %v856 = vpow.pop %v855
        %v857 = vmul.f32 %v826, 1.442695
        %v858 = vpow.pop %v857
        %v859 = vld [vmem:[#allocation4] sm:$0xff]
        %v860 = vld [vmem:[#allocation4 + $0x8] sm:$0xff]
        %v861 = vld [vmem:[#allocation4 + $0x10] sm:$0xff]
        %v862 = vld [vmem:[#allocation4 + $0x18] sm:$0xff]
        %v863 = vld [vmem:[#allocation4 + $0x20] sm:$0xff]
        %v864 = vld [vmem:[#allocation4 + $0x28] sm:$0xff]
        %v865 = vld [vmem:[#allocation4 + $0x30] sm:$0xff]
        %v866 = vld [vmem:[#allocation4 + $0x38] sm:$0xff]
        %v867 = vld [vmem:[#allocation4 + $0x40] sm:$0xff]
        %v868 = vld [vmem:[#allocation4 + $0x48] sm:$0xff]
        %v869 = vld [vmem:[#allocation4 + $0x50] sm:$0xff]
        %v870 = vld [vmem:[#allocation4 + $0x58] sm:$0xff]
        %v871 = vld [vmem:[#allocation4 + $0x60] sm:$0xff]
        %v872 = vld [vmem:[#allocation4 + $0x68] sm:$0xff]
        %v873 = vld [vmem:[#allocation4 + $0x70] sm:$0xff]
        %v874 = vld [vmem:[#allocation4 + $0x78] sm:$0xff]
        %v875 = vmul.f32 %v700, %v859
        %v876 = vmul.f32 %v702, %v860
        %v877 = vmul.f32 %v704, %v861
        %v878 = vmul.f32 %v706, %v862
        %v879 = vmul.f32 %v708, %v863
        %v880 = vmul.f32 %v710, %v864
        %v881 = vmul.f32 %v712, %v865
        %v882 = vmul.f32 %v714, %v866
        %v883 = vmul.f32 %v716, %v867
        %v884 = vmul.f32 %v718, %v868
        %v885 = vmul.f32 %v720, %v869
        %v886 = vmul.f32 %v722, %v870
        %v887 = vmul.f32 %v724, %v871
        %v888 = vmul.f32 %v726, %v872
        %v889 = vmul.f32 %v728, %v873
        %v890 = vmul.f32 %v730, %v874
        %891 = vadd.xlane.f32.xlu0 %v828
        %v892 = vpop.xlane.xlu0 %891
        %893 = vadd.xlane.f32.xlu0 %v830
        %v894 = vpop.xlane.xlu0 %893
        %895 = vadd.xlane.f32.xlu0 %v832
        %v896 = vpop.xlane.xlu0 %895
        %897 = vadd.xlane.f32.xlu0 %v834
        %v898 = vpop.xlane.xlu0 %897
        %899 = vadd.xlane.f32.xlu0 %v836
        %v900 = vpop.xlane.xlu0 %899
        %901 = vadd.xlane.f32.xlu0 %v838
        %v902 = vpop.xlane.xlu0 %901
        %903 = vadd.xlane.f32.xlu0 %v840
        %v904 = vpop.xlane.xlu0 %903
        %905 = vadd.xlane.f32.xlu0 %v842
        %v906 = vpop.xlane.xlu0 %905
        %907 = vadd.xlane.f32.xlu0 %v844
        %v908 = vpop.xlane.xlu0 %907
        %909 = vadd.xlane.f32.xlu0 %v846
        %v910 = vpop.xlane.xlu0 %909
        %911 = vadd.xlane.f32.xlu0 %v848
        %v912 = vpop.xlane.xlu0 %911
        %913 = vadd.xlane.f32.xlu0 %v850
        %v914 = vpop.xlane.xlu0 %913
        %915 = vadd.xlane.f32.xlu0 %v852
        %v916 = vpop.xlane.xlu0 %915
        %917 = vadd.xlane.f32.xlu0 %v854
        %v918 = vpop.xlane.xlu0 %917
        %919 = vadd.xlane.f32.xlu0 %v856
        %v920 = vpop.xlane.xlu0 %919
        %921 = vadd.xlane.f32.xlu0 %v858
        %v922 = vpop.xlane.xlu0 %921
        %v923 = vadd.f32 %v875, %v892
        %v924 = vadd.f32 %v876, %v894
        %v925 = vadd.f32 %v877, %v896
        %v926 = vadd.f32 %v878, %v898
        %v927 = vadd.f32 %v879, %v900
        %v928 = vadd.f32 %v880, %v902
        %v929 = vadd.f32 %v881, %v904
        %v930 = vadd.f32 %v882, %v906
        %v931 = vadd.f32 %v883, %v908
        %v932 = vadd.f32 %v884, %v910
        %v933 = vadd.f32 %v885, %v912
        %v934 = vadd.f32 %v886, %v914
        %v935 = vadd.f32 %v887, %v916
        %v936 = vadd.f32 %v888, %v918
        %v937 = vadd.f32 %v889, %v920
        %v938 = vadd.f32 %v890, %v922
        %vm939 = vcmask 7168
        %940 = vst.msk [vmem:[#allocation4] sm:$0xff] %vm939, %v923
        %941 = vst.msk [vmem:[#allocation4 + $0x8] sm:$0xff] %vm939, %v924
        %942 = vst.msk [vmem:[#allocation4 + $0x10] sm:$0xff] %vm939, %v925
        %943 = vst.msk [vmem:[#allocation4 + $0x18] sm:$0xff] %vm939, %v926
        %944 = vst.msk [vmem:[#allocation4 + $0x20] sm:$0xff] %vm939, %v927
        %945 = vst.msk [vmem:[#allocation4 + $0x28] sm:$0xff] %vm939, %v928
        %946 = vst.msk [vmem:[#allocation4 + $0x30] sm:$0xff] %vm939, %v929
        %947 = vst.msk [vmem:[#allocation4 + $0x38] sm:$0xff] %vm939, %v930
        %948 = vst.msk [vmem:[#allocation4 + $0x40] sm:$0xff] %vm939, %v931
        %949 = vst.msk [vmem:[#allocation4 + $0x48] sm:$0xff] %vm939, %v932
        %950 = vst.msk [vmem:[#allocation4 + $0x50] sm:$0xff] %vm939, %v933
        %951 = vst.msk [vmem:[#allocation4 + $0x58] sm:$0xff] %vm939, %v934
        %952 = vst.msk [vmem:[#allocation4 + $0x60] sm:$0xff] %vm939, %v935
        %953 = vst.msk [vmem:[#allocation4 + $0x68] sm:$0xff] %vm939, %v936
        %954 = vst.msk [vmem:[#allocation4 + $0x70] sm:$0xff] %vm939, %v937
        %955 = vst.msk [vmem:[#allocation4 + $0x78] sm:$0xff] %vm939, %v938
        %v956 = vld [vmem:[#allocation5] sm:$0xff]
        %v957 = vld [vmem:[#allocation5 + $0x8] sm:$0xff]
        %v958 = vld [vmem:[#allocation5 + $0x10] sm:$0xff]
        %v959 = vld [vmem:[#allocation5 + $0x18] sm:$0xff]
        %v960 = vld [vmem:[#allocation5 + $0x20] sm:$0xff]
        %v961 = vld [vmem:[#allocation5 + $0x28] sm:$0xff]
        %v962 = vld [vmem:[#allocation5 + $0x30] sm:$0xff]
        %v963 = vld [vmem:[#allocation5 + $0x38] sm:$0xff]
        %v964 = vld [vmem:[#allocation5 + $0x40] sm:$0xff]
        %v965 = vld [vmem:[#allocation5 + $0x48] sm:$0xff]
        %v966 = vld [vmem:[#allocation5 + $0x50] sm:$0xff]
        %v967 = vld [vmem:[#allocation5 + $0x58] sm:$0xff]
        %v968 = vld [vmem:[#allocation5 + $0x60] sm:$0xff]
        %v969 = vld [vmem:[#allocation5 + $0x68] sm:$0xff]
        %v970 = vld [vmem:[#allocation5 + $0x70] sm:$0xff]
        %v971 = vld [vmem:[#allocation5 + $0x78] sm:$0xff]
        %973 = vset.pattern.permute.xlu0 0
        %974 = vperm.xlu0 %973, %v700
        %v975 = vpop.permute.xlu0 %974
        %978 = vset.pattern.permute.xlu0 0
        %979 = vperm.xlu0 %978, %v702
        %v980 = vpop.permute.xlu0 %979
        %983 = vset.pattern.permute.xlu0 0
        %984 = vperm.xlu0 %983, %v704
        %v985 = vpop.permute.xlu0 %984
        %988 = vset.pattern.permute.xlu0 0
        %989 = vperm.xlu0 %988, %v706
        %v990 = vpop.permute.xlu0 %989
        %993 = vset.pattern.permute.xlu0 0
        %994 = vperm.xlu0 %993, %v708
        %v995 = vpop.permute.xlu0 %994
        %998 = vset.pattern.permute.xlu0 0
        %999 = vperm.xlu0 %998, %v710
        %v1000 = vpop.permute.xlu0 %999
        %1003 = vset.pattern.permute.xlu0 0
        %1004 = vperm.xlu0 %1003, %v712
        %v1005 = vpop.permute.xlu0 %1004
        %1008 = vset.pattern.permute.xlu0 0
        %1009 = vperm.xlu0 %1008, %v714
        %v1010 = vpop.permute.xlu0 %1009
        %1013 = vset.pattern.permute.xlu0 0
        %1014 = vperm.xlu0 %1013, %v716
        %v1015 = vpop.permute.xlu0 %1014
        %1018 = vset.pattern.permute.xlu0 0
        %1019 = vperm.xlu0 %1018, %v718
        %v1020 = vpop.permute.xlu0 %1019
        %1023 = vset.pattern.permute.xlu0 0
        %1024 = vperm.xlu0 %1023, %v720
        %v1025 = vpop.permute.xlu0 %1024
        %1028 = vset.pattern.permute.xlu0 0
        %1029 = vperm.xlu0 %1028, %v722
        %v1030 = vpop.permute.xlu0 %1029
        %1033 = vset.pattern.permute.xlu0 0
        %1034 = vperm.xlu0 %1033, %v724
        %v1035 = vpop.permute.xlu0 %1034
        %1038 = vset.pattern.permute.xlu0 0
        %1039 = vperm.xlu0 %1038, %v726
        %v1040 = vpop.permute.xlu0 %1039
        %1043 = vset.pattern.permute.xlu0 0
        %1044 = vperm.xlu0 %1043, %v728
        %v1045 = vpop.permute.xlu0 %1044
        %1048 = vset.pattern.permute.xlu0 0
        %1049 = vperm.xlu0 %1048, %v730
        %v1050 = vpop.permute.xlu0 %1049
        %v1052 = vmul.f32 %v975, %v956
        %v1053 = vmul.f32 %v980, %v957
        %v1054 = vmul.f32 %v985, %v958
        %v1055 = vmul.f32 %v990, %v959
        %v1056 = vmul.f32 %v995, %v960
        %v1057 = vmul.f32 %v1000, %v961
        %v1058 = vmul.f32 %v1005, %v962
        %v1059 = vmul.f32 %v1010, %v963
        %v1060 = vmul.f32 %v1015, %v964
        %v1061 = vmul.f32 %v1020, %v965
        %v1062 = vmul.f32 %v1025, %v966
        %v1063 = vmul.f32 %v1030, %v967
        %v1064 = vmul.f32 %v1035, %v968
        %v1065 = vmul.f32 %v1040, %v969
        %v1066 = vmul.f32 %v1045, %v970
        %v1067 = vmul.f32 %v1050, %v971
        %1068 = vmatprep.subr.mxu0 0.0
        %1069 = vmatpush1.msra.mxu0 %v436
        %1070 = vmatprep.subr.mxu0 0.0
        %1071 = vmatpush1.msra.mxu0 %v437
        %1072 = vmatprep.subr.mxu0 0.0
        %1073 = vmatpush1.msra.mxu0 %v438
        %1074 = vmatprep.subr.mxu0 0.0
        %1075 = vmatpush1.msra.mxu0 %v439
        %1076 = vmatprep.subr.mxu0 0.0
        %1077 = vmatpush1.msra.mxu0 %v440
        %1078 = vmatprep.subr.mxu0 0.0
        %1079 = vmatpush1.msra.mxu0 %v441
        %1080 = vmatprep.subr.mxu0 0.0
        %1081 = vmatpush1.msra.mxu0 %v442
        %1082 = vmatprep.subr.mxu0 0.0
        %1083 = vmatpush1.msra.mxu0 %v443
        %1084 = vmatprep.subr.mxu0 0.0
        %1085 = vmatpush1.msra.mxu0 %v444
        %1086 = vmatprep.subr.mxu0 0.0
        %1087 = vmatpush1.msra.mxu0 %v445
        %1088 = vmatprep.subr.mxu0 0.0
        %1089 = vmatpush1.msra.mxu0 %v446
        %1090 = vmatprep.subr.mxu0 0.0
        %1091 = vmatpush1.msra.mxu0 %v447
        %1092 = vmatprep.subr.mxu0 0.0
        %1093 = vmatpush1.msra.mxu0 %v448
        %1094 = vmatprep.subr.mxu0 0.0
        %1095 = vmatpush1.msra.mxu0 %v449
        %1096 = vmatprep.subr.mxu0 0.0
        %1097 = vmatpush1.msra.mxu0 %v450
        %1098 = vmatprep.subr.mxu0 0.0
        %1099 = vmatpush1.msra.mxu0 %v451
        %1100 = vmatprep.subr.mxu0 0.0
        %1101 = vmatpush1.msra.mxu0 0.0
        %1102 = vmatprep.subr.mxu0 0.0
        %1103 = vmatpush1.msra.mxu0 0.0
        %1104 = vmatprep.subr.mxu0 0.0
        %1105 = vmatpush1.msra.mxu0 0.0
        %1106 = vmatprep.subr.mxu0 0.0
        %1107 = vmatpush1.msra.mxu0 0.0
        %1108 = vmatprep.subr.mxu0 0.0
        %1109 = vmatpush1.msra.mxu0 0.0
        %1110 = vmatprep.subr.mxu0 0.0
        %1111 = vmatpush1.msra.mxu0 0.0
        %1112 = vmatprep.subr.mxu0 0.0
        %1113 = vmatpush1.msra.mxu0 0.0
        %1114 = vmatprep.subr.mxu0 0.0
        %1115 = vmatpush1.msra.mxu0 0.0
        %1116 = vmatprep.subr.mxu0 0.0
        %1117 = vmatpush1.msra.mxu0 0.0
        %1118 = vmatprep.subr.mxu0 0.0
        %1119 = vmatpush1.msra.mxu0 0.0
        %1120 = vmatprep.subr.mxu0 0.0
        %1121 = vmatpush1.msra.mxu0 0.0
        %1122 = vmatprep.subr.mxu0 0.0
        %1123 = vmatpush1.msra.mxu0 0.0
        %1124 = vmatprep.subr.mxu0 0.0
        %1125 = vmatpush1.msra.mxu0 0.0
        %1126 = vmatprep.subr.mxu0 0.0
        %1127 = vmatpush1.msra.mxu0 0.0
        %1128 = vmatprep.subr.mxu0 0.0
        %1129 = vmatpush1.msra.mxu0 0.0
        %1130 = vmatprep.subr.mxu0 0.0
        %1131 = vmatpush1.msra.mxu0 0.0
        %1132 = vmatprep.mubr.f32.mxu0 0.0
        %1133 = vmatmul.mubr.f32.gmra.mrb[0].mxu0 %v828
        %v1134 = vpop.f32.mrb[0].mxu0
        %v1135 = vadd.f32 0.0, %v1134
        %v1136 = vpop.f32.mrb[0].mxu0
        %1137 = vmatprep.mubr.f32.mxu0 0.0
        %1138 = vmatmul.mubr.f32.gmra.mrb[0].mxu0 %v830
        %v1139 = vpop.f32.mrb[0].mxu0
        %v1140 = vadd.f32 0.0, %v1139
        %v1141 = vpop.f32.mrb[0].mxu0
        %1142 = vmatprep.mubr.f32.mxu0 0.0
        %1143 = vmatmul.mubr.f32.gmra.mrb[0].mxu0 %v832
        %v1144 = vpop.f32.mrb[0].mxu0
        %v1145 = vadd.f32 0.0, %v1144
        %v1146 = vpop.f32.mrb[0].mxu0
        %1147 = vmatprep.mubr.f32.mxu0 0.0
        %1148 = vmatmul.mubr.f32.gmra.mrb[0].mxu0 %v834
        %v1149 = vpop.f32.mrb[0].mxu0
        %v1150 = vadd.f32 0.0, %v1149
        %v1151 = vpop.f32.mrb[0].mxu0
        %1152 = vmatprep.mubr.f32.mxu0 0.0
        %1153 = vmatmul.mubr.f32.gmra.mrb[0].mxu0 %v836
        %v1154 = vpop.f32.mrb[0].mxu0
        %v1155 = vadd.f32 0.0, %v1154
        %v1156 = vpop.f32.mrb[0].mxu0
        %1157 = vmatprep.mubr.f32.mxu0 0.0
        %1158 = vmatmul.mubr.f32.gmra.mrb[0].mxu0 %v838
        %v1159 = vpop.f32.mrb[0].mxu0
        %v1160 = vadd.f32 0.0, %v1159
        %v1161 = vpop.f32.mrb[0].mxu0
        %1162 = vmatprep.mubr.f32.mxu0 0.0
        %1163 = vmatmul.mubr.f32.gmra.mrb[0].mxu0 %v840
        %v1164 = vpop.f32.mrb[0].mxu0
        %v1165 = vadd.f32 0.0, %v1164
        %v1166 = vpop.f32.mrb[0].mxu0
        %1167 = vmatprep.mubr.f32.mxu0 0.0
        %1168 = vmatmul.mubr.f32.gmra.mrb[0].mxu0 %v842
        %v1169 = vpop.f32.mrb[0].mxu0
        %v1170 = vadd.f32 0.0, %v1169
        %v1171 = vpop.f32.mrb[0].mxu0
        %1172 = vmatprep.mubr.f32.mxu0 0.0
        %1173 = vmatmul.mubr.f32.gmra.mrb[0].mxu0 %v844
        %v1174 = vpop.f32.mrb[0].mxu0
        %v1175 = vadd.f32 0.0, %v1174
        %v1176 = vpop.f32.mrb[0].mxu0
        %1177 = vmatprep.mubr.f32.mxu0 0.0
        %1178 = vmatmul.mubr.f32.gmra.mrb[0].mxu0 %v846
        %v1179 = vpop.f32.mrb[0].mxu0
        %v1180 = vadd.f32 0.0, %v1179
        %v1181 = vpop.f32.mrb[0].mxu0
        %1182 = vmatprep.mubr.f32.mxu0 0.0
        %1183 = vmatmul.mubr.f32.gmra.mrb[0].mxu0 %v848
        %v1184 = vpop.f32.mrb[0].mxu0
        %v1185 = vadd.f32 0.0, %v1184
        %v1186 = vpop.f32.mrb[0].mxu0
        %1187 = vmatprep.mubr.f32.mxu0 0.0
        %1188 = vmatmul.mubr.f32.gmra.mrb[0].mxu0 %v850
        %v1189 = vpop.f32.mrb[0].mxu0
        %v1190 = vadd.f32 0.0, %v1189
        %v1191 = vpop.f32.mrb[0].mxu0
        %1192 = vmatprep.mubr.f32.mxu0 0.0
        %1193 = vmatmul.mubr.f32.gmra.mrb[0].mxu0 %v852
        %v1194 = vpop.f32.mrb[0].mxu0
        %v1195 = vadd.f32 0.0, %v1194
        %v1196 = vpop.f32.mrb[0].mxu0
        %1197 = vmatprep.mubr.f32.mxu0 0.0
        %1198 = vmatmul.mubr.f32.gmra.mrb[0].mxu0 %v854
        %v1199 = vpop.f32.mrb[0].mxu0
        %v1200 = vadd.f32 0.0, %v1199
        %v1201 = vpop.f32.mrb[0].mxu0
        %1202 = vmatprep.mubr.f32.mxu0 0.0
        %1203 = vmatmul.mubr.f32.gmra.mrb[0].mxu0 %v856
        %v1204 = vpop.f32.mrb[0].mxu0
        %v1205 = vadd.f32 0.0, %v1204
        %v1206 = vpop.f32.mrb[0].mxu0
        %1207 = vmatprep.mubr.f32.mxu0 0.0
        %1208 = vmatmul.mubr.f32.gmra.mrb[0].mxu0 %v858
        %v1209 = vpop.f32.mrb[0].mxu0
        %v1210 = vadd.f32 0.0, %v1209
        %v1211 = vpop.f32.mrb[0].mxu0
        %1212 = vdwg.mxu0
        %v1213 = vadd.f32 %v1052, %v1135
        %v1214 = vadd.f32 %v1053, %v1140
        %v1215 = vadd.f32 %v1054, %v1145
        %v1216 = vadd.f32 %v1055, %v1150
        %v1217 = vadd.f32 %v1056, %v1155
        %v1218 = vadd.f32 %v1057, %v1160
        %v1219 = vadd.f32 %v1058, %v1165
        %v1220 = vadd.f32 %v1059, %v1170
        %v1221 = vadd.f32 %v1060, %v1175
        %v1222 = vadd.f32 %v1061, %v1180
        %v1223 = vadd.f32 %v1062, %v1185
        %v1224 = vadd.f32 %v1063, %v1190
        %v1225 = vadd.f32 %v1064, %v1195
        %v1226 = vadd.f32 %v1065, %v1200
        %v1227 = vadd.f32 %v1066, %v1205
        %v1228 = vadd.f32 %v1067, %v1210
        %1229 = vst [vmem:[#allocation5] sm:$0xff] %v1213
        %1230 = vst [vmem:[#allocation5 + $0x8] sm:$0xff] %v1214
        %1231 = vst [vmem:[#allocation5 + $0x10] sm:$0xff] %v1215
        %1232 = vst [vmem:[#allocation5 + $0x18] sm:$0xff] %v1216
        %1233 = vst [vmem:[#allocation5 + $0x20] sm:$0xff] %v1217
        %1234 = vst [vmem:[#allocation5 + $0x28] sm:$0xff] %v1218
        %1235 = vst [vmem:[#allocation5 + $0x30] sm:$0xff] %v1219
        %1236 = vst [vmem:[#allocation5 + $0x38] sm:$0xff] %v1220
        %1237 = vst [vmem:[#allocation5 + $0x40] sm:$0xff] %v1221
        %1238 = vst [vmem:[#allocation5 + $0x48] sm:$0xff] %v1222
        %1239 = vst [vmem:[#allocation5 + $0x50] sm:$0xff] %v1223
        %1240 = vst [vmem:[#allocation5 + $0x58] sm:$0xff] %v1224
        %1241 = vst [vmem:[#allocation5 + $0x60] sm:$0xff] %v1225
        %1242 = vst [vmem:[#allocation5 + $0x68] sm:$0xff] %v1226
        %1243 = vst [vmem:[#allocation5 + $0x70] sm:$0xff] %v1227
        %1244 = vst [vmem:[#allocation5 + $0x78] sm:$0xff] %v1228
        %1245 = vst.msk [vmem:[#allocation3] sm:$0xff] %vm939, %v667
        %1246 = vst.msk [vmem:[#allocation3 + $0x8] sm:$0xff] %vm939, %v668
        %1247 = vst.msk [vmem:[#allocation3 + $0x10] sm:$0xff] %vm939, %v669
        %1248 = vst.msk [vmem:[#allocation3 + $0x18] sm:$0xff] %vm939, %v670
        %1249 = vst.msk [vmem:[#allocation3 + $0x20] sm:$0xff] %vm939, %v671
        %1250 = vst.msk [vmem:[#allocation3 + $0x28] sm:$0xff] %vm939, %v672
        %1251 = vst.msk [vmem:[#allocation3 + $0x30] sm:$0xff] %vm939, %v673
        %1252 = vst.msk [vmem:[#allocation3 + $0x38] sm:$0xff] %vm939, %v674
        %1253 = vst.msk [vmem:[#allocation3 + $0x40] sm:$0xff] %vm939, %v675
        %1254 = vst.msk [vmem:[#allocation3 + $0x48] sm:$0xff] %vm939, %v676
        %1255 = vst.msk [vmem:[#allocation3 + $0x50] sm:$0xff] %vm939, %v677
        %1256 = vst.msk [vmem:[#allocation3 + $0x58] sm:$0xff] %vm939, %v678
        %1257 = vst.msk [vmem:[#allocation3 + $0x60] sm:$0xff] %vm939, %v679
        %1258 = vst.msk [vmem:[#allocation3 + $0x68] sm:$0xff] %vm939, %v680
        %1259 = vst.msk [vmem:[#allocation3 + $0x70] sm:$0xff] %vm939, %v681
        %1260 = vst.msk [vmem:[#allocation3 + $0x78] sm:$0xff] %vm939, %v682
        // Predicated region
        $region49: #{tpu_custom_call.1} parent=31 // pred_check
          %p1261 = pneg %p303
        $region50: #{tpu_custom_call.1} parent=31 // pred_check_branch
          %1263 = sbr.rel (%p1261) target = $region52
        $region51: #{tpu_custom_call.1} parent=31 // pred_region
          %v1264 = vld [vmem:[#allocation4] sm:$0xff]
          %v1265 = vld [vmem:[#allocation4 + $0x8] sm:$0xff]
          %v1266 = vld [vmem:[#allocation4 + $0x10] sm:$0xff]
          %v1267 = vld [vmem:[#allocation4 + $0x18] sm:$0xff]
          %v1268 = vld [vmem:[#allocation4 + $0x20] sm:$0xff]
          %v1269 = vld [vmem:[#allocation4 + $0x28] sm:$0xff]
          %v1270 = vld [vmem:[#allocation4 + $0x30] sm:$0xff]
          %v1271 = vld [vmem:[#allocation4 + $0x38] sm:$0xff]
          %v1272 = vld [vmem:[#allocation4 + $0x40] sm:$0xff]
          %v1273 = vld [vmem:[#allocation4 + $0x48] sm:$0xff]
          %v1274 = vld [vmem:[#allocation4 + $0x50] sm:$0xff]
          %v1275 = vld [vmem:[#allocation4 + $0x58] sm:$0xff]
          %v1276 = vld [vmem:[#allocation4 + $0x60] sm:$0xff]
          %v1277 = vld [vmem:[#allocation4 + $0x68] sm:$0xff]
          %v1278 = vld [vmem:[#allocation4 + $0x70] sm:$0xff]
          %v1279 = vld [vmem:[#allocation4 + $0x78] sm:$0xff]
          %vm1280 = vcmp.eq.f32.partialorder %v1264, 0.0
          %vm1281 = vcmp.eq.f32.partialorder %v1265, 0.0
          %vm1282 = vcmp.eq.f32.partialorder %v1266, 0.0
          %vm1283 = vcmp.eq.f32.partialorder %v1267, 0.0
          %vm1284 = vcmp.eq.f32.partialorder %v1268, 0.0
          %vm1285 = vcmp.eq.f32.partialorder %v1269, 0.0
          %vm1286 = vcmp.eq.f32.partialorder %v1270, 0.0
          %vm1287 = vcmp.eq.f32.partialorder %v1271, 0.0
          %vm1288 = vcmp.eq.f32.partialorder %v1272, 0.0
          %vm1289 = vcmp.eq.f32.partialorder %v1273, 0.0
          %vm1290 = vcmp.eq.f32.partialorder %v1274, 0.0
          %vm1291 = vcmp.eq.f32.partialorder %v1275, 0.0
          %vm1292 = vcmp.eq.f32.partialorder %v1276, 0.0
          %vm1293 = vcmp.eq.f32.partialorder %v1277, 0.0
          %vm1294 = vcmp.eq.f32.partialorder %v1278, 0.0
          %vm1295 = vcmp.eq.f32.partialorder %v1279, 0.0
          %v1296 = vsel %vm1280, 1.0, %v1264
          %v1297 = vsel %vm1281, 1.0, %v1265
          %v1298 = vsel %vm1282, 1.0, %v1266
          %v1299 = vsel %vm1283, 1.0, %v1267
          %v1300 = vsel %vm1284, 1.0, %v1268
          %v1301 = vsel %vm1285, 1.0, %v1269
          %v1302 = vsel %vm1286, 1.0, %v1270
          %v1303 = vsel %vm1287, 1.0, %v1271
          %v1304 = vsel %vm1288, 1.0, %v1272
          %v1305 = vsel %vm1289, 1.0, %v1273
          %v1306 = vsel %vm1290, 1.0, %v1274
          %v1307 = vsel %vm1291, 1.0, %v1275
          %v1308 = vsel %vm1292, 1.0, %v1276
          %v1309 = vsel %vm1293, 1.0, %v1277
          %v1310 = vsel %vm1294, 1.0, %v1278
          %v1311 = vsel %vm1295, 1.0, %v1279
          %v1312 = vld [vmem:[#allocation5] sm:$0xff]
          %v1313 = vld [vmem:[#allocation5 + $0x8] sm:$0xff]
          %v1314 = vld [vmem:[#allocation5 + $0x10] sm:$0xff]
          %v1315 = vld [vmem:[#allocation5 + $0x18] sm:$0xff]
          %v1316 = vld [vmem:[#allocation5 + $0x20] sm:$0xff]
          %v1317 = vld [vmem:[#allocation5 + $0x28] sm:$0xff]
          %v1318 = vld [vmem:[#allocation5 + $0x30] sm:$0xff]
          %v1319 = vld [vmem:[#allocation5 + $0x38] sm:$0xff]
          %v1320 = vld [vmem:[#allocation5 + $0x40] sm:$0xff]
          %v1321 = vld [vmem:[#allocation5 + $0x48] sm:$0xff]
          %v1322 = vld [vmem:[#allocation5 + $0x50] sm:$0xff]
          %v1323 = vld [vmem:[#allocation5 + $0x58] sm:$0xff]
          %v1324 = vld [vmem:[#allocation5 + $0x60] sm:$0xff]
          %v1325 = vld [vmem:[#allocation5 + $0x68] sm:$0xff]
          %v1326 = vld [vmem:[#allocation5 + $0x70] sm:$0xff]
          %v1327 = vld [vmem:[#allocation5 + $0x78] sm:$0xff]
          %1329 = vset.pattern.permute.xlu0 0
          %1330 = vperm.xlu0 %1329, %v1296
          %v1331 = vpop.permute.xlu0 %1330
          %1334 = vset.pattern.permute.xlu0 0
          %1335 = vperm.xlu0 %1334, %v1297
          %v1336 = vpop.permute.xlu0 %1335
          %1339 = vset.pattern.permute.xlu0 0
          %1340 = vperm.xlu0 %1339, %v1298
          %v1341 = vpop.permute.xlu0 %1340
          %1344 = vset.pattern.permute.xlu0 0
          %1345 = vperm.xlu0 %1344, %v1299
          %v1346 = vpop.permute.xlu0 %1345
          %1349 = vset.pattern.permute.xlu0 0
          %1350 = vperm.xlu0 %1349, %v1300
          %v1351 = vpop.permute.xlu0 %1350
          %1354 = vset.pattern.permute.xlu0 0
          %1355 = vperm.xlu0 %1354, %v1301
          %v1356 = vpop.permute.xlu0 %1355
          %1359 = vset.pattern.permute.xlu0 0
          %1360 = vperm.xlu0 %1359, %v1302
          %v1361 = vpop.permute.xlu0 %1360
          %1364 = vset.pattern.permute.xlu0 0
          %1365 = vperm.xlu0 %1364, %v1303
          %v1366 = vpop.permute.xlu0 %1365
          %1369 = vset.pattern.permute.xlu0 0
          %1370 = vperm.xlu0 %1369, %v1304
          %v1371 = vpop.permute.xlu0 %1370
          %1374 = vset.pattern.permute.xlu0 0
          %1375 = vperm.xlu0 %1374, %v1305
          %v1376 = vpop.permute.xlu0 %1375
          %1379 = vset.pattern.permute.xlu0 0
          %1380 = vperm.xlu0 %1379, %v1306
          %v1381 = vpop.permute.xlu0 %1380
          %1384 = vset.pattern.permute.xlu0 0
          %1385 = vperm.xlu0 %1384, %v1307
          %v1386 = vpop.permute.xlu0 %1385
          %1389 = vset.pattern.permute.xlu0 0
          %1390 = vperm.xlu0 %1389, %v1308
          %v1391 = vpop.permute.xlu0 %1390
          %1394 = vset.pattern.permute.xlu0 0
          %1395 = vperm.xlu0 %1394, %v1309
          %v1396 = vpop.permute.xlu0 %1395
          %1399 = vset.pattern.permute.xlu0 0
          %1400 = vperm.xlu0 %1399, %v1310
          %v1401 = vpop.permute.xlu0 %1400
          %1404 = vset.pattern.permute.xlu0 0
          %1405 = vperm.xlu0 %1404, %v1311
          %v1406 = vpop.permute.xlu0 %1405
          %v1408 = vrcp.pop %v1331
          %v1409 = vmul.f32 %v1312, %v1408
          %v1410 = vrcp.pop %v1336
          %v1411 = vmul.f32 %v1313, %v1410
          %v1412 = vrcp.pop %v1341
          %v1413 = vmul.f32 %v1314, %v1412
          %v1414 = vrcp.pop %v1346
          %v1415 = vmul.f32 %v1315, %v1414
          %v1416 = vrcp.pop %v1351
          %v1417 = vmul.f32 %v1316, %v1416
          %v1418 = vrcp.pop %v1356
          %v1419 = vmul.f32 %v1317, %v1418
          %v1420 = vrcp.pop %v1361
          %v1421 = vmul.f32 %v1318, %v1420
          %v1422 = vrcp.pop %v1366
          %v1423 = vmul.f32 %v1319, %v1422
          %v1424 = vrcp.pop %v1371
          %v1425 = vmul.f32 %v1320, %v1424
          %v1426 = vrcp.pop %v1376
          %v1427 = vmul.f32 %v1321, %v1426
          %v1428 = vrcp.pop %v1381
          %v1429 = vmul.f32 %v1322, %v1428
          %v1430 = vrcp.pop %v1386
          %v1431 = vmul.f32 %v1323, %v1430
          %v1432 = vrcp.pop %v1391
          %v1433 = vmul.f32 %v1324, %v1432
          %v1434 = vrcp.pop %v1396
          %v1435 = vmul.f32 %v1325, %v1434
          %v1436 = vrcp.pop %v1401
          %v1437 = vmul.f32 %v1326, %v1436
          %v1438 = vrcp.pop %v1406
          %v1439 = vmul.f32 %v1327, %v1438
          %1440 = vst [vmem:[%s298] sm:$0xff] %v1409
          %1441 = vst [vmem:[%s298 + $0x8] sm:$0xff] %v1411
          %1442 = vst [vmem:[%s298 + $0x10] sm:$0xff] %v1413
          %1443 = vst [vmem:[%s298 + $0x18] sm:$0xff] %v1415
          %1444 = vst [vmem:[%s298 + $0x20] sm:$0xff] %v1417
          %1445 = vst [vmem:[%s298 + $0x28] sm:$0xff] %v1419
          %1446 = vst [vmem:[%s298 + $0x30] sm:$0xff] %v1421
          %1447 = vst [vmem:[%s298 + $0x38] sm:$0xff] %v1423
          %1448 = vst [vmem:[%s298 + $0x40] sm:$0xff] %v1425
          %1449 = vst [vmem:[%s298 + $0x48] sm:$0xff] %v1427
          %1450 = vst [vmem:[%s298 + $0x50] sm:$0xff] %v1429
          %1451 = vst [vmem:[%s298 + $0x58] sm:$0xff] %v1431
          %1452 = vst [vmem:[%s298 + $0x60] sm:$0xff] %v1433
          %1453 = vst [vmem:[%s298 + $0x68] sm:$0xff] %v1435
          %1454 = vst [vmem:[%s298 + $0x70] sm:$0xff] %v1437
          %1455 = vst [vmem:[%s298 + $0x78] sm:$0xff] %v1439
        $region52: #{tpu_custom_call.1} parent=31 // pred_fallthru
          _
        %s1456 = sand.u32 %s136, 1
        %s1457 = scalar_lea.sflag [#allocation8], %s1456
        %s1458 = sand.u32 %s136, 1
        %s1459 = smul.addr %s1458, 128
        %s1460 = scalar_lea.vmem [#allocation12], %s1459
        // Predicated region
        $region53: #{tpu_custom_call.1} parent=31 // pred_check
          %p1461 = pneg %p146
        $region54: #{tpu_custom_call.1} parent=31 // pred_check_branch
          %1463 = sbr.rel (%p1461) target = $region56
        $region55: #{tpu_custom_call.1} parent=31 // pred_region
          %s1464 = smul.u32 16, %s29
          %s1466 = ssub.s32 2048, 2048
          %1467 = vsyncadd %s1457, %s1466
          %s1468 = smul.addr %s28, 16
          %s1469 = sadd.s32 %s1464, %s1468
          %s1470 = smul.addr %s1469, 128
          %s1471 = scalar_lea.hbm %s3, %s1470
          %s1472 = sshll.u32 %s1460, 4
          %s1473 = int_to_ptr.vmem [resolvable:$true] %s1472
          %1478 = dma.vmem_to_hbm [thread:$0]  %s1473, 2048, %s1471, %s1457, 128, 128, 8
        $region56: #{tpu_custom_call.1} parent=31 // pred_fallthru
          _
      $region32: #{tpu_custom_call.1} parent=5 // pred_fallthru
        _
      %p1479 = scmp.le.s32.totalorder 2, %s18
      // Predicated region
      $region57: #{tpu_custom_call.1} parent=5 // pred_check
        %p1480 = pneg %p1479
      $region58: #{tpu_custom_call.1} parent=5 // pred_check_branch
        %1482 = sbr.rel (%p1480) target = $region60
      $region59: #{tpu_custom_call.1} parent=5 // pred_region
        %s1483 = ssub.s32 %s18, 2
        // Predicated region
        $region61: #{tpu_custom_call.1} parent=59 // pred_check
          %p1484 = pneg %p152
        $region62: #{tpu_custom_call.1} parent=59 // pred_check_branch
          %1486 = sbr.rel (%p1484) target = $region64
        $region63: #{tpu_custom_call.1} parent=59 // pred_region
          %s1487 = sand.u32 %s137, 1
          %s1488 = scalar_lea.sflag [#allocation8], %s1487
          %s1489 = sand.u32 %s137, 1
          %s1490 = smul.addr %s1489, 128
          %s1491 = scalar_lea.vmem [#allocation12], %s1490
          %1492 = dma.done %s1488, 2048
        $region64: #{tpu_custom_call.1} parent=59 // pred_fallthru
          _
      $region60: #{tpu_custom_call.1} parent=5 // pred_fallthru
        _
    $region6: #{tpu_custom_call.1} parent=1 // loop_footer
      %s22 = sadd.s32 1, %s18
    $region7: #{tpu_custom_call.1} parent=1 // loop_footer_branch
      %17 = sbr.rel target = $region3
    $region8: #{tpu_custom_call.1} parent=1 // loop_exit
      _
    %1493 = vsyncpa [#allocation7], 1
    %s1494 = scalar_lea.sflag [#allocation7], 1
    %1495 = vsyncpa %s1494, 1
    %1496 = vsyncpa [#allocation10], 1
    %s1497 = scalar_lea.sflag [#allocation10], 1
    %1498 = vsyncpa %s1497, 1
    %1499 = vsyncpa [#allocation8], 1
    %s1500 = scalar_lea.sflag [#allocation8], 1
    %1501 = vsyncpa %s1500, 1

</llo_original>
